<compile_context>
chip_gen: v5e
topology: v5e:2x2
jax: 0.10.0
libtpu: 0.0.40
codegen_flags: <defaults>
</compile_context>

<pallas_src>
import functools

import jax
import jax.numpy as jnp
from jax.experimental import pallas as pl
from jax.experimental.pallas import tpu as pltpu


def _mlp_tail(x_t, w1_ref, w2_ref, w3_ref, out_ref):
    """score^T = W3 @ relu(W2 @ relu(W1 @ x^T)); x_t is (D, tile_e) f32."""
    h1 = jnp.maximum(
        jnp.dot(w1_ref[...], x_t, preferred_element_type=jnp.float32), 0.0)
    h2 = jnp.maximum(
        jnp.dot(w2_ref[...], h1, preferred_element_type=jnp.float32), 0.0)
    out = jnp.dot(w3_ref[...], h2, preferred_element_type=jnp.float32)
    out_ref[...] = out.astype(out_ref.dtype)        # (C, tile_e) lane-dense store


def _edge_mlp_fused_kernel(src_ref, dst_ref, feat_t_ref,
                           w1_ref, w2_ref, w3_ref, out_ref):
    """Fused gather + MLP: feat^T resident in VMEM; BOTH endpoint gathers are
    done with a single one-hot matmul on the MXU (exact: one 1.0 per column)."""
    n_nodes = feat_t_ref.shape[1]                    # feat^T is (D, N)
    tile_e = src_ref.shape[1]                        # index tiles are (1, tile_e)

    idx = jnp.concatenate([src_ref[...], dst_ref[...]], axis=1)   # (1, 2*tile_e)
    node_iota = jax.lax.broadcasted_iota(jnp.int32, (n_nodes, 2 * tile_e), 0)
    onehot = (node_iota == idx).astype(jnp.float32)               # (N, 2*tile_e)

    gathered = jnp.dot(feat_t_ref[...], onehot,
                       preferred_element_type=jnp.float32)        # (D, 2*tile_e)
    hu_t = gathered[:, :tile_e]
    hv_t = gathered[:, tile_e:]
    _mlp_tail(hu_t * hv_t, w1_ref, w2_ref, w3_ref, out_ref)


def _edge_mlp_gathered_kernel(hu_ref, hv_ref, w1_ref, w2_ref, w3_ref, out_ref):
    """Fallback for large graphs: h_u / h_v pre-gathered edge-major (tile_e, D)
    via row dynamic-slice DMAs outside the kernel; transpose on-chip (XLU)."""
    x_t = (hu_ref[...] * hv_ref[...]).T              # (D, tile_e)
    _mlp_tail(x_t, w1_ref, w2_ref, w3_ref, out_ref)


def _vmem_budget_bytes():
    """Generation-aware VMEM budget: ~75% of physical per-TC VMEM, with
    headroom for Mosaic internals.  Falls back to a v7x-safe 48 MiB when the
    hardware can't be queried (e.g. interpret mode on CPU)."""
    try:
        cap = pltpu.get_tpu_info().vmem_capacity_bytes
    except Exception:
        cap = 64 * 1024 * 1024                       # conservative: v7x per-TC
    return max(16 * 1024 * 1024, min(int(cap) * 3 // 4, int(cap) - (8 << 20)))


@functools.partial(jax.jit, static_argnames=("tile_e", "feature_major_output"))
def mlp_predictor_scores(feat, src_idx, dst_idx, w1, w2, w3, *,
                         tile_e=None, feature_major_output=False):
    """Per-edge class scores.

    feat    : (N, D) node features
    src_idx : (E,)   int32 source node per edge
    dst_idx : (E,)   int32 destination node per edge
    w1, w2  : (D, D) Linear weights, PyTorch (out, in) layout
    w3      : (C, D)
    returns : (E, C) f32 scores (or (C, E) if feature_major_output=True, which
              skips the epilogue transpose for layout-flexible consumers).
    """
    n_nodes, d = feat.shape
    c = w3.shape[0]
    e = src_idx.shape[0]

    if e == 0:                                       # degenerate-input guard
        z = jnp.zeros((c, 0), jnp.float32)
        return z if feature_major_output else z.T

    if tile_e is None:
        # >= 2 grid steps for medium/large E so dimension_semantics=("parallel",)
        # can shard steps across v7x's 2 TensorCores; cap 4096 to bound the
        # one-hot working set; powers of 2 >= 128 keep every store lane-dense.
        tile_e = max(128, min(4096, pl.next_power_of_2(pl.cdiv(e, 2))))
    e_pad = pl.cdiv(e, tile_e) * tile_e
    pad = e_pad - e
    grid = (e_pad // tile_e,)

    feat_f32 = feat.astype(jnp.float32)
    w1_f = w1.astype(jnp.float32)
    w2_f = w2.astype(jnp.float32)
    w3_f = w3.astype(jnp.float32)

    vmem_budget = _vmem_budget_bytes()
    compiler_params = pltpu.CompilerParams(
        dimension_semantics=("parallel",),           # edge tiles are independent
        vmem_limit_bytes=vmem_budget,
    )

    # VMEM estimate for the feat-resident fused path (counting default
    # double-buffering of every pipelined block).
    fused_vmem_bytes = (
        2 * d * n_nodes * 4                          # resident feat^T
        + 2 * (2 * d * d + c * d) * 4                # resident weights
        + 2 * 2 * tile_e * 4                         # index tiles (2 inputs)
        + 2 * c * tile_e * 4                         # output tiles
        + 2 * n_nodes * tile_e * 4                   # (N, 2*tile_e) one-hot
        + 10 * d * tile_e * 4                        # gathered rows + activations
    )
    # N-cutoff: the one-hot gather costs ~2*N compares + 2*D*N MXU MACs per
    # edge, so for large N the pre-gathered fallback wins (earliest on v5e).
    use_fused = (fused_vmem_bytes <= vmem_budget) and (n_nodes <= 4096)

    w_specs = [
        pl.BlockSpec((d, d), lambda i: (0, 0)),      # W1 (grid-invariant)
        pl.BlockSpec((d, d), lambda i: (0, 0)),      # W2
        pl.BlockSpec((c, d), lambda i: (0, 0)),      # W3
    ]
    out_spec = pl.BlockSpec((c, tile_e), lambda i: (0, i))   # lane-dense blocks

    if use_fused:
        src2d = jnp.pad(src_idx.astype(jnp.int32), (0, pad)).reshape(1, e_pad)
        dst2d = jnp.pad(dst_idx.astype(jnp.int32), (0, pad)).reshape(1, e_pad)
        out_t = pl.pallas_call(
            _edge_mlp_fused_kernel,
            out_shape=jax.ShapeDtypeStruct((c, e_pad), jnp.float32),
            grid_spec=pltpu.PrefetchScalarGridSpec(
                num_scalar_prefetch=0,
                grid=grid,
                in_specs=[
                    pl.BlockSpec((1, tile_e), lambda i: (0, i)),     # src idx
                    pl.BlockSpec((1, tile_e), lambda i: (0, i)),     # dst idx
                    pl.BlockSpec((d, n_nodes), lambda i: (0, 0)),    # feat^T
                ] + w_specs,
                out_specs=out_spec,
            ),
            compiler_params=compiler_params,
        )(src2d, dst2d, feat_f32.T, w1_f, w2_f, w3_f)
    else:
        # Row-major (major-axis) gathers lower to efficient dynamic-slice DMAs;
        # the per-tile transpose happens on-chip in the kernel.
        hu = jnp.pad(feat_f32[src_idx], ((0, pad), (0, 0)))          # (e_pad, D)
        hv = jnp.pad(feat_f32[dst_idx], ((0, pad), (0, 0)))
        out_t = pl.pallas_call(
            _edge_mlp_gathered_kernel,
            out_shape=jax.ShapeDtypeStruct((c, e_pad), jnp.float32),
            grid_spec=pltpu.PrefetchScalarGridSpec(
                num_scalar_prefetch=0,
                grid=grid,
                in_specs=[
                    pl.BlockSpec((tile_e, d), lambda i: (i, 0)),     # h_u tile
                    pl.BlockSpec((tile_e, d), lambda i: (i, 0)),     # h_v tile
                ] + w_specs,
                out_specs=out_spec,
            ),
            compiler_params=compiler_params,
        )(hu, hv, w1_f, w2_f, w3_f)

    out_t = out_t[:, :e]                             # drop padded edges
    if feature_major_output:
        return out_t                                 # (C, E), no transpose
    return out_t.T                                   # (E, C), module layout


def xavier_uniform(key, shape):
    # PyTorch nn.init.xavier_uniform_ on a Linear weight of shape (out, in).
    fan_out, fan_in = shape
    bound = (6.0 / (fan_in + fan_out)) ** 0.5
    return jax.random.uniform(key, shape, jnp.float32, -bound, bound)


if __name__ == "__main__":
    in_units = 32          # D
    num_classes = 8        # C
    num_nodes = 64         # N
    num_edges = 2000       # E (not a tile multiple -> exercises padding)

    key = jax.random.PRNGKey(0)
    k_feat, k_src, k_dst, k_w1, k_w2, k_w3 = jax.random.split(key, 6)

    feat = jax.random.normal(k_feat, (num_nodes, in_units), jnp.float32)
    src_idx = jax.random.randint(k_src, (num_edges,), 0, num_nodes, jnp.int32)
    dst_idx = jax.random.randint(k_dst, (num_edges,), 0, num_nodes, jnp.int32)

    # Parameters (PyTorch Linear stores (out, in)).
    w1 = xavier_uniform(k_w1, (in_units, in_units))
    w2 = xavier_uniform(k_w2, (in_units, in_units))
    w3 = xavier_uniform(k_w3, (num_classes, in_units))
    # TODO(synk): `self.b` and `self.dropout` are unused in the module's
    # forward scoring path, so they are intentionally omitted here.

    scores = mlp_predictor_scores(feat, src_idx, dst_idx, w1, w2, w3)
    jax.block_until_ready(scores)
    assert scores.shape == (num_edges, num_classes)

    # Exact f32 PyTorch-semantics reference (precision pinned so the check is
    # stable on TPU regardless of the backend's default matmul precision).
    hp = jax.lax.Precision.HIGHEST
    x = feat[src_idx] * feat[dst_idx]
    ref = jnp.maximum(jnp.dot(x, w1.T, precision=hp), 0.0)
    ref = jnp.maximum(jnp.dot(ref, w2.T, precision=hp), 0.0)
    ref = jnp.dot(ref, w3.T, precision=hp)
    max_err = float(jnp.max(jnp.abs(scores - ref)))
    assert jnp.allclose(scores, ref, atol=5e-2, rtol=5e-2), max_err

    print("KERNEL_OK")
</pallas_src>

<mosaic_0001>
module attributes {stable_mosaic.version = 11 : i64} {
  func.func @_edge_mlp_fused_kernel(%arg0: i32, %arg1: memref<1x1024xi32, #tpu.memory_space<vmem>>, %arg2: memref<1x1024xi32, #tpu.memory_space<vmem>>, %arg3: memref<32x64xf32, #tpu.memory_space<vmem>>, %arg4: memref<32x32xf32, #tpu.memory_space<vmem>>, %arg5: memref<32x32xf32, #tpu.memory_space<vmem>>, %arg6: memref<8x32xf32, #tpu.memory_space<vmem>>, %arg7: memref<8x1024xf32, #tpu.memory_space<vmem>>) attributes {dimension_semantics = [#tpu.dimension_semantics<parallel>], iteration_bounds = array<i64: 2>, scalar_prefetch = 0 : i64, scratch_operands = 0 : i64, tpu.core_type = #tpu.core_type<tc>, window_params = [{transform_indices = @transform_0, window_bounds = array<i64: 1, 1024>}, {transform_indices = @transform_1, window_bounds = array<i64: 1, 1024>}, {pipeline_mode = #tpu.pipeline_mode<synchronous>, transform_indices = @transform_2, window_bounds = array<i64: 32, 64>}, {pipeline_mode = #tpu.pipeline_mode<synchronous>, transform_indices = @transform_3, window_bounds = array<i64: 32, 32>}, {pipeline_mode = #tpu.pipeline_mode<synchronous>, transform_indices = @transform_4, window_bounds = array<i64: 32, 32>}, {pipeline_mode = #tpu.pipeline_mode<synchronous>, transform_indices = @transform_5, window_bounds = array<i64: 8, 32>}, {transform_indices = @transform_6, window_bounds = array<i64: 8, 1024>}]} {
    %c0 = arith.constant 0 : index
    %c0_0 = arith.constant 0 : index
    %0 = vector.load %arg1[%c0, %c0_0] : memref<1x1024xi32, #tpu.memory_space<vmem>>, vector<1x1024xi32>
    %c0_1 = arith.constant 0 : index
    %c0_2 = arith.constant 0 : index
    %1 = vector.load %arg2[%c0_1, %c0_2] : memref<1x1024xi32, #tpu.memory_space<vmem>>, vector<1x1024xi32>
    %2 = tpu.concatenate %0, %1 in 1 : vector<1x1024xi32>, vector<1x1024xi32> -> vector<1x2048xi32>
    %3 = tpu.iota {dimensions = array<i32: 0>} : vector<64x2048xi32>
    %4 = vector.broadcast %2 : vector<1x2048xi32> to vector<64x2048xi32>
    %5 = arith.cmpi eq, %3, %4 : vector<64x2048xi32>
    %6 = arith.extui %5 : vector<64x2048xi1> to vector<64x2048xi32>
    %7 = arith.sitofp %6 : vector<64x2048xi32> to vector<64x2048xf32>
    %c0_3 = arith.constant 0 : index
    %c0_4 = arith.constant 0 : index
    %8 = vector.load %arg3[%c0_3, %c0_4] : memref<32x64xf32, #tpu.memory_space<vmem>>, vector<32x64xf32>
    %cst = arith.constant dense<0.000000e+00> : vector<32x2048xf32>
    %9 = tpu.matmul %8, %7, %cst {dimension_numbers = #tpu.dot_dimension_numbers<[1], [0], [0], [1], [0, 0, 1, 1], [], []>} : vector<32x64xf32>, vector<64x2048xf32>, vector<32x2048xf32> -> vector<32x2048xf32>
    %10 = vector.extract_strided_slice %9 {offsets = [0, 0], sizes = [32, 1024], strides = [1, 1]} : vector<32x2048xf32> to vector<32x1024xf32>
    %11 = vector.extract_strided_slice %9 {offsets = [0, 1024], sizes = [32, 1024], strides = [1, 1]} : vector<32x2048xf32> to vector<32x1024xf32>
    %12 = arith.mulf %10, %11 : vector<32x1024xf32>
    %c0_5 = arith.constant 0 : index
    %c0_6 = arith.constant 0 : index
    %13 = vector.load %arg4[%c0_5, %c0_6] : memref<32x32xf32, #tpu.memory_space<vmem>>, vector<32x32xf32>
    %cst_7 = arith.constant dense<0.000000e+00> : vector<32x1024xf32>
    %14 = tpu.matmul %13, %12, %cst_7 {dimension_numbers = #tpu.dot_dimension_numbers<[1], [0], [0], [1], [0, 0, 1, 1], [], []>} : vector<32x32xf32>, vector<32x1024xf32>, vector<32x1024xf32> -> vector<32x1024xf32>
    %cst_8 = arith.constant 0.000000e+00 : f32
    %15 = vector.broadcast %cst_8 : f32 to vector<32x1024xf32>
    %16 = arith.maximumf %14, %15 : vector<32x1024xf32>
    %c0_9 = arith.constant 0 : index
    %c0_10 = arith.constant 0 : index
    %17 = vector.load %arg5[%c0_9, %c0_10] : memref<32x32xf32, #tpu.memory_space<vmem>>, vector<32x32xf32>
    %cst_11 = arith.constant dense<0.000000e+00> : vector<32x1024xf32>
    %18 = tpu.matmul %17, %16, %cst_11 {dimension_numbers = #tpu.dot_dimension_numbers<[1], [0], [0], [1], [0, 0, 1, 1], [], []>} : vector<32x32xf32>, vector<32x1024xf32>, vector<32x1024xf32> -> vector<32x1024xf32>
    %cst_12 = arith.constant 0.000000e+00 : f32
    %19 = vector.broadcast %cst_12 : f32 to vector<32x1024xf32>
    %20 = arith.maximumf %18, %19 : vector<32x1024xf32>
    %c0_13 = arith.constant 0 : index
    %c0_14 = arith.constant 0 : index
    %21 = vector.load %arg6[%c0_13, %c0_14] : memref<8x32xf32, #tpu.memory_space<vmem>>, vector<8x32xf32>
    %cst_15 = arith.constant dense<0.000000e+00> : vector<8x1024xf32>
    %22 = tpu.matmul %21, %20, %cst_15 {dimension_numbers = #tpu.dot_dimension_numbers<[1], [0], [0], [1], [0, 0, 1, 1], [], []>} : vector<8x32xf32>, vector<32x1024xf32>, vector<8x1024xf32> -> vector<8x1024xf32>
    %c0_16 = arith.constant 0 : index
    %c0_17 = arith.constant 0 : index
    %23 = vector.load %arg7[%c0_16, %c0_17] : memref<8x1024xf32, #tpu.memory_space<vmem>>, vector<8x1024xf32>
    tpu.vector_store %arg7[%c0_16, %c0_17], %22 {strides = array<i32>} : memref<8x1024xf32, #tpu.memory_space<vmem>>, vector<8x1024xf32>,
    return
  }
  func.func @transform_0(%arg0: i32) -> (i32, i32) {
    %c0_i32 = arith.constant 0 : i32
    %c0_i32_0 = arith.constant 0 : i32
    return %c0_i32, %arg0 : i32, i32
  }
  func.func @transform_1(%arg0: i32) -> (i32, i32) {
    %c0_i32 = arith.constant 0 : i32
    %c0_i32_0 = arith.constant 0 : i32
    return %c0_i32, %arg0 : i32, i32
  }
  func.func @transform_2(%arg0: i32) -> (i32, i32) {
    %c0_i32 = arith.constant 0 : i32
    %c0_i32_0 = arith.constant 0 : i32
    %c0_i32_1 = arith.constant 0 : i32
    return %c0_i32, %c0_i32_0 : i32, i32
  }
  func.func @transform_3(%arg0: i32) -> (i32, i32) {
    %c0_i32 = arith.constant 0 : i32
    %c0_i32_0 = arith.constant 0 : i32
    %c0_i32_1 = arith.constant 0 : i32
    return %c0_i32, %c0_i32_0 : i32, i32
  }
  func.func @transform_4(%arg0: i32) -> (i32, i32) {
    %c0_i32 = arith.constant 0 : i32
    %c0_i32_0 = arith.constant 0 : i32
    %c0_i32_1 = arith.constant 0 : i32
    return %c0_i32, %c0_i32_0 : i32, i32
  }
  func.func @transform_5(%arg0: i32) -> (i32, i32) {
    %c0_i32 = arith.constant 0 : i32
    %c0_i32_0 = arith.constant 0 : i32
    %c0_i32_1 = arith.constant 0 : i32
    return %c0_i32, %c0_i32_0 : i32, i32
  }
  func.func @transform_6(%arg0: i32) -> (i32, i32) {
    %c0_i32 = arith.constant 0 : i32
    %c0_i32_0 = arith.constant 0 : i32
    return %c0_i32, %arg0 : i32, i32
  }
}

</mosaic_0001>

<llo_original>
// kernel: mlp_predictor_scores.1
$region0: #{mlp_predictor_scores.1}
  #allocation0 [shape = 'u32[]', space=smem, size = 0x4, offset = 0x4, fixed_abs, tag = 'smem constant byte address 0x4 - core index']
  #allocation1 [shape = 'u32[72,128]{1,0:T(1,128)}', space=vmem, size = 0x9000, scoped, tag = 'internal scratch']
  %s0 = inlined_call_operand.vmem [shape: s32[1,2048], index: 0, kind: input, shape index: {}]
  %s1 = inlined_call_operand.vmem [shape: s32[1,2048], index: 1, kind: input, shape index: {}]
  %s2 = inlined_call_operand.vmem [shape: f32[32,64], index: 2, kind: input, shape index: {}]
  %s3 = inlined_call_operand.hbm [shape: f32[32,32], index: 3, kind: input, shape index: {}]
  %s4 = inlined_call_operand.hbm [shape: f32[32,32], index: 4, kind: input, shape index: {}]
  %s5 = inlined_call_operand.vmem [shape: f32[8,32], index: 5, kind: input, shape index: {}]
  %s6 = inlined_call_operand.vmem [shape: f32[8,2048], index: 6, kind: output, shape index: {}]
  %s7 = sld [smem:[#allocation0]]
  $region65: #{mlp_predictor_scores.1} parent=0
    _
  %s9 = ssub.s32 1, %s7
  %s10 = scalar_select 0, %s9, %s7
  $region1: #{mlp_predictor_scores.1} parent=0
    #allocation2 [shape = 'u8[16384]{0}', space=vmem, size = 0x4000, scoped, tag = 'input window, operand 3, single buffered']
    #allocation3 [shape = 's32[2]{0}', space=sflag, size = 0x8, scoped, tag = 'scoped memory for mlp_predictor_scores.1']
    #allocation4 [shape = 'u8[16384]{0}', space=vmem, size = 0x4000, scoped, tag = 'input window, operand 4, single buffered']
    #allocation5 [shape = 's32[1]{0}', space=sflag, size = 0x4, scoped, tag = 'scoped memory for mlp_predictor_scores.1']
    %11 = vsyncpa [#allocation3], 0
    %12 = vsyncpa [#allocation5], 0
    loop: start=0, step=1, limit=4
    $region2: #{mlp_predictor_scores.1} parent=1 // loop_pre_header
      _
    $region3: #{mlp_predictor_scores.1} parent=1 // loop_header
      %s14 = sphi 0, %s18
      %p15 = scmp.ge.s32.totalorder %s14, 4
      %s24 = sphi 0, %s26
      %s27 = sphi 0, %s24
      %s28 = sphi 0, %s27
      %s44 = sphi 0, %s28
      %s50 = sphi 0, %s52
      %s53 = sphi 0, %s50
      %s54 = sphi 0, %s53
      %s70 = sphi 0, %s54
      %s74 = sphi 0, %s74
      %s76 = sphi 0, %s74
      %s77 = sphi 0, %s76
      %s91 = sphi 0, %s77
      %s95 = sphi 0, %s95
      %s97 = sphi 0, %s95
      %s98 = sphi 0, %s97
      %s112 = sphi 0, %s98
      %s116 = sphi 0, %s116
      %s118 = sphi 0, %s116
      %s119 = sphi 0, %s118
      %s133 = sphi 0, %s119
      %s137 = sphi 0, %s137
      %s139 = sphi 0, %s137
      %s140 = sphi 0, %s139
      %s154 = sphi 0, %s140
      %s160 = sphi 0, %s162
      %s163 = sphi 0, %s160
      %s164 = sphi 0, %s163
      %s180 = sphi 0, %s164
    $region4: #{mlp_predictor_scores.1} parent=1 // loop_header_branch
      %17 = sbr.rel (%p15) target = $region8
    $region5: #{mlp_predictor_scores.1} parent=1 // loop_body
      %s19 = ssub.s32 %s14, 1
      %s20 = ssub.s32 %s14, 2
      %s21 = sadd.s32 %s14, 1
      %s22 = ssub.s32 %s14, %s21
      %p23 = scmp.eq.s32.totalorder %s22, 0
      %s25 = sadd.s32 %s24, 1
      %s26 = scalar_select %p23, %s24, %s25
      %p29 = pneg %p23
      %p30 = scmp.eq.s32.totalorder %s14, 1
      %p31 = por %p29, %p30
      %p32 = scmp.ne.s32.totalorder %s24, %s27
      %p33 = scmp.eq.s32.totalorder %s14, 0
      %p34 = por %p32, %p33
      %p35 = scmp.ne.s32.totalorder %s24, %s27
      %p36 = scmp.eq.s32.totalorder %s19, 1
      %p37 = por %p35, %p36
      %p38 = scmp.ne.s32.totalorder %s27, %s28
      %p39 = scmp.eq.s32.totalorder %s19, 0
      %p40 = por %p38, %p39
      %p41 = scmp.ne.s32.totalorder %s27, %s28
      %p42 = scmp.eq.s32.totalorder %s20, 1
      %p43 = por %p41, %p42
      %p45 = scmp.ne.s32.totalorder %s28, %s44
      %p46 = scmp.eq.s32.totalorder %s20, 0
      %p47 = por %p45, %p46
      %s48 = ssub.s32 %s14, %s21
      %p49 = scmp.eq.s32.totalorder %s48, 0
      %s51 = sadd.s32 %s50, 1
      %s52 = scalar_select %p49, %s50, %s51
      %p55 = pneg %p49
      %p56 = scmp.eq.s32.totalorder %s14, 1
      %p57 = por %p55, %p56
      %p58 = scmp.ne.s32.totalorder %s50, %s53
      %p59 = scmp.eq.s32.totalorder %s14, 0
      %p60 = por %p58, %p59
      %p61 = scmp.ne.s32.totalorder %s50, %s53
      %p62 = scmp.eq.s32.totalorder %s19, 1
      %p63 = por %p61, %p62
      %p64 = scmp.ne.s32.totalorder %s53, %s54
      %p65 = scmp.eq.s32.totalorder %s19, 0
      %p66 = por %p64, %p65
      %p67 = scmp.ne.s32.totalorder %s53, %s54
      %p68 = scmp.eq.s32.totalorder %s20, 1
      %p69 = por %p67, %p68
      %p71 = scmp.ne.s32.totalorder %s54, %s70
      %p72 = scmp.eq.s32.totalorder %s20, 0
      %p73 = por %p71, %p72
      %s75 = sadd.s32 %s74, 1
      %p78 = scmp.eq.s32.totalorder %s14, 1
      %p79 = scmp.ne.s32.totalorder %s74, %s76
      %p80 = scmp.eq.s32.totalorder %s14, 0
      %p81 = por %p79, %p80
      %p82 = scmp.ne.s32.totalorder %s74, %s76
      %p83 = scmp.eq.s32.totalorder %s19, 1
      %p84 = por %p82, %p83
      %p85 = scmp.ne.s32.totalorder %s76, %s77
      %p86 = scmp.eq.s32.totalorder %s19, 0
      %p87 = por %p85, %p86
      %p88 = scmp.ne.s32.totalorder %s76, %s77
      %p89 = scmp.eq.s32.totalorder %s20, 1
      %p90 = por %p88, %p89
      %p92 = scmp.ne.s32.totalorder %s77, %s91
      %p93 = scmp.eq.s32.totalorder %s20, 0
      %p94 = por %p92, %p93
      %s96 = sadd.s32 %s95, 1
      %p99 = scmp.eq.s32.totalorder %s14, 1
      %p100 = scmp.ne.s32.totalorder %s95, %s97
      %p101 = scmp.eq.s32.totalorder %s14, 0
      %p102 = por %p100, %p101
      %p103 = scmp.ne.s32.totalorder %s95, %s97
      %p104 = scmp.eq.s32.totalorder %s19, 1
      %p105 = por %p103, %p104
      %p106 = scmp.ne.s32.totalorder %s97, %s98
      %p107 = scmp.eq.s32.totalorder %s19, 0
      %p108 = por %p106, %p107
      %p109 = scmp.ne.s32.totalorder %s97, %s98
      %p110 = scmp.eq.s32.totalorder %s20, 1
      %p111 = por %p109, %p110
      %p113 = scmp.ne.s32.totalorder %s98, %s112
      %p114 = scmp.eq.s32.totalorder %s20, 0
      %p115 = por %p113, %p114
      %s117 = sadd.s32 %s116, 1
      %p120 = scmp.eq.s32.totalorder %s14, 1
      %p121 = scmp.ne.s32.totalorder %s116, %s118
      %p122 = scmp.eq.s32.totalorder %s14, 0
      %p123 = por %p121, %p122
      %p124 = scmp.ne.s32.totalorder %s116, %s118
      %p125 = scmp.eq.s32.totalorder %s19, 1
      %p126 = por %p124, %p125
      %p127 = scmp.ne.s32.totalorder %s118, %s119
      %p128 = scmp.eq.s32.totalorder %s19, 0
      %p129 = por %p127, %p128
      %p130 = scmp.ne.s32.totalorder %s118, %s119
      %p131 = scmp.eq.s32.totalorder %s20, 1
      %p132 = por %p130, %p131
      %p134 = scmp.ne.s32.totalorder %s119, %s133
      %p135 = scmp.eq.s32.totalorder %s20, 0
      %p136 = por %p134, %p135
      %s138 = sadd.s32 %s137, 1
      %p141 = scmp.eq.s32.totalorder %s14, 1
      %p142 = scmp.ne.s32.totalorder %s137, %s139
      %p143 = scmp.eq.s32.totalorder %s14, 0
      %p144 = por %p142, %p143
      %p145 = scmp.ne.s32.totalorder %s137, %s139
      %p146 = scmp.eq.s32.totalorder %s19, 1
      %p147 = por %p145, %p146
      %p148 = scmp.ne.s32.totalorder %s139, %s140
      %p149 = scmp.eq.s32.totalorder %s19, 0
      %p150 = por %p148, %p149
      %p151 = scmp.ne.s32.totalorder %s139, %s140
      %p152 = scmp.eq.s32.totalorder %s20, 1
      %p153 = por %p151, %p152
      %p155 = scmp.ne.s32.totalorder %s140, %s154
      %p156 = scmp.eq.s32.totalorder %s20, 0
      %p157 = por %p155, %p156
      %s158 = ssub.s32 %s14, %s21
      %p159 = scmp.eq.s32.totalorder %s158, 0
      %s161 = sadd.s32 %s160, 1
      %s162 = scalar_select %p159, %s160, %s161
      %p165 = pneg %p159
      %p166 = scmp.eq.s32.totalorder %s14, 1
      %p167 = por %p165, %p166
      %p168 = scmp.ne.s32.totalorder %s160, %s163
      %p169 = scmp.eq.s32.totalorder %s14, 0
      %p170 = por %p168, %p169
      %p171 = scmp.ne.s32.totalorder %s160, %s163
      %p172 = scmp.eq.s32.totalorder %s19, 1
      %p173 = por %p171, %p172
      %p174 = scmp.ne.s32.totalorder %s163, %s164
      %p175 = scmp.eq.s32.totalorder %s19, 0
      %p176 = por %p174, %p175
      %p177 = scmp.ne.s32.totalorder %s163, %s164
      %p178 = scmp.eq.s32.totalorder %s20, 1
      %p179 = por %p177, %p178
      %p181 = scmp.ne.s32.totalorder %s164, %s180
      %p182 = scmp.eq.s32.totalorder %s20, 0
      %p183 = por %p181, %p182
      %p184 = scmp.le.s32.totalorder 1, %s14
      %p185 = scmp.lt.s32.totalorder %s14, 3
      %p186 = pnand %p184, %p185
      %p187 = pneg %p186
      // Predicated region
      $region9: #{mlp_predictor_scores.1} parent=5 // pred_check
        _
      $region10: #{mlp_predictor_scores.1} parent=5 // pred_check_branch
        %189 = sbr.rel (%p186) target = $region12
      $region11: #{mlp_predictor_scores.1} parent=5 // pred_region
        %s190 = ssub.s32 %s14, 1
        // Predicated region
        $region13: #{mlp_predictor_scores.1} parent=11 // pred_check
          %p191 = pneg %p87
        $region14: #{mlp_predictor_scores.1} parent=11 // pred_check_branch
          %193 = sbr.rel (%p191) target = $region16
        $region15: #{mlp_predictor_scores.1} parent=11 // pred_region
          _
        $region16: #{mlp_predictor_scores.1} parent=11 // pred_fallthru
          _
        // Predicated region
        $region17: #{mlp_predictor_scores.1} parent=11 // pred_check
          %p194 = pneg %p108
        $region18: #{mlp_predictor_scores.1} parent=11 // pred_check_branch
          %196 = sbr.rel (%p194) target = $region20
        $region19: #{mlp_predictor_scores.1} parent=11 // pred_region
          %198 = vsyncadd [#allocation3], 0
          %s199 = sshll.u32 %s3, 4
          %s200 = int_to_ptr.hbm [resolvable:$true] %s199
          %s201 = sshll.u32 [#allocation2], 4
          %s202 = int_to_ptr.vmem [resolvable:$true] %s201
          %207 = dma.hbm_to_vmem [thread:$0]  %s200, 512, %s202, [#allocation3], 128, 128, 8
        $region20: #{mlp_predictor_scores.1} parent=11 // pred_fallthru
          _
        // Predicated region
        $region21: #{mlp_predictor_scores.1} parent=11 // pred_check
          %p208 = pneg %p129
        $region22: #{mlp_predictor_scores.1} parent=11 // pred_check_branch
          %210 = sbr.rel (%p208) target = $region24
        $region23: #{mlp_predictor_scores.1} parent=11 // pred_region
          %212 = vsyncadd [#allocation5], 0
          %s213 = sshll.u32 %s4, 4
          %s214 = int_to_ptr.hbm [resolvable:$true] %s213
          %s215 = sshll.u32 [#allocation4], 4
          %s216 = int_to_ptr.vmem [resolvable:$true] %s215
          %221 = dma.hbm_to_vmem [thread:$0]  %s214, 512, %s216, [#allocation5], 128, 128, 8
        $region24: #{mlp_predictor_scores.1} parent=11 // pred_fallthru
          _
        // Predicated region
        $region25: #{mlp_predictor_scores.1} parent=11 // pred_check
          %p222 = pneg %p150
        $region26: #{mlp_predictor_scores.1} parent=11 // pred_check_branch
          %224 = sbr.rel (%p222) target = $region28
        $region27: #{mlp_predictor_scores.1} parent=11 // pred_region
          _
        $region28: #{mlp_predictor_scores.1} parent=11 // pred_fallthru
          _
      $region12: #{mlp_predictor_scores.1} parent=5 // pred_fallthru
        _
      %p225 = scmp.lt.s32.totalorder %s14, 2
      // Predicated region
      $region29: #{mlp_predictor_scores.1} parent=5 // pred_check
        %p226 = pneg %p225
      $region30: #{mlp_predictor_scores.1} parent=5 // pred_check_branch
        %228 = sbr.rel (%p226) target = $region32
      $region31: #{mlp_predictor_scores.1} parent=5 // pred_region
        // Predicated region
        $region33: #{mlp_predictor_scores.1} parent=31 // pred_check
          %p229 = pneg %p34
        $region34: #{mlp_predictor_scores.1} parent=31 // pred_check_branch
          %231 = sbr.rel (%p229) target = $region36
        $region35: #{mlp_predictor_scores.1} parent=31 // pred_region
          %s232 = smul.u32 8, %s14
          %p233 = scmp.lt.s32.totalorder %s232, 15
          %s234 = scalar_select %p233, %s232, 15
          %s235 = scalar_lea.vmem %s0, %s234
          %s236 = smul.u32 8, %s14
        $region36: #{mlp_predictor_scores.1} parent=31 // pred_fallthru
          _
        // Predicated region
        $region37: #{mlp_predictor_scores.1} parent=31 // pred_check
          %p237 = pneg %p60
        $region38: #{mlp_predictor_scores.1} parent=31 // pred_check_branch
          %239 = sbr.rel (%p237) target = $region40
        $region39: #{mlp_predictor_scores.1} parent=31 // pred_region
          %s240 = smul.u32 8, %s14
          %p241 = scmp.lt.s32.totalorder %s240, 15
          %s242 = scalar_select %p241, %s240, 15
          %s243 = scalar_lea.vmem %s1, %s242
          %s244 = smul.u32 8, %s14
        $region40: #{mlp_predictor_scores.1} parent=31 // pred_fallthru
          _
      $region32: #{mlp_predictor_scores.1} parent=5 // pred_fallthru
        _
      %p245 = scmp.le.s32.totalorder 1, %s14
      %p246 = scmp.lt.s32.totalorder %s14, 3
      %p247 = pnand %p245, %p246
      %p248 = pneg %p247
      // Predicated region
      $region41: #{mlp_predictor_scores.1} parent=5 // pred_check
        _
      $region42: #{mlp_predictor_scores.1} parent=5 // pred_check_branch
        %250 = sbr.rel (%p247) target = $region44
      $region43: #{mlp_predictor_scores.1} parent=5 // pred_region
        %s251 = ssub.s32 %s14, 1
        // Predicated region
        $region45: #{mlp_predictor_scores.1} parent=43 // pred_check
          %p252 = pneg %p108
        $region46: #{mlp_predictor_scores.1} parent=43 // pred_check_branch
          %254 = sbr.rel (%p252) target = $region48
        $region47: #{mlp_predictor_scores.1} parent=43 // pred_region
          %256 = dma.done [#allocation3], 512
        $region48: #{mlp_predictor_scores.1} parent=43 // pred_fallthru
          _
        // Predicated region
        $region49: #{mlp_predictor_scores.1} parent=43 // pred_check
          %p257 = pneg %p129
        $region50: #{mlp_predictor_scores.1} parent=43 // pred_check_branch
          %259 = sbr.rel (%p257) target = $region52
        $region51: #{mlp_predictor_scores.1} parent=43 // pred_region
          %261 = dma.done [#allocation5], 512
        $region52: #{mlp_predictor_scores.1} parent=43 // pred_fallthru
          _
        %s262 = smul.u32 8, %s19
        %p263 = scmp.lt.s32.totalorder %s262, 15
        %s264 = scalar_select %p263, %s262, 15
        %s265 = scalar_lea.vmem %s0, %s264
        %p266 = pneg %p40
        %p267 = pneg %p37
        %s268 = smul.u32 8, %s19
        %p269 = scmp.lt.s32.totalorder %s268, 15
        %s270 = scalar_select %p269, %s268, 15
        %s271 = scalar_lea.vmem %s1, %s270
        %p272 = pneg %p66
        %p273 = pneg %p63
        %p274 = pneg %p87
        %p275 = pneg %p84
        %p276 = pneg %p108
        %p277 = pneg %p105
        %p278 = pneg %p129
        %p279 = pneg %p126
        %p280 = pneg %p150
        %p281 = pneg %p147
        %p282 = pneg %p176
        %p283 = pneg %p173
        %s284 = smul.u32 8, %s19
        %p285 = scmp.lt.s32.totalorder %s284, 15
        %s286 = scalar_select %p285, %s284, 15
        %s287 = smul.addr %s286, 8
        %s288 = scalar_lea.vmem %s6, %s287
        %s289 = smul.u32 8, %s19
        %p290 = scmp.lt.s32.totalorder %s289, 15
        %s291 = scalar_select %p290, %s289, 15
        %s292 = scalar_lea.vmem %s0, %s291
        %s293 = smul.u32 8, %s19
        %s294 = smul.u32 8, %s19
        %p295 = scmp.lt.s32.totalorder %s294, 15
        %s296 = scalar_select %p295, %s294, 15
        %s297 = scalar_lea.vmem %s1, %s296
        %s298 = smul.u32 8, %s19
        %s299 = smul.u32 8, %s19
        %p300 = scmp.lt.s32.totalorder %s299, 15
        %s301 = scalar_select %p300, %s299, 15
        %s302 = smul.addr %s301, 8
        %s303 = scalar_lea.vmem %s6, %s302
        %s304 = smul.u32 8, %s19
        %v305 = vld [vmem:[%s292] sm:$0xff]
        %v306 = vld [vmem:[%s297] sm:$0xff]
        %v307 = vperm.slane %v305, 0
        %v308 = vperm.slane %v305, 1
        %v309 = vperm.slane %v305, 2
        %v310 = vperm.slane %v305, 3
        %v311 = vperm.slane %v305, 4
        %v312 = vperm.slane %v305, 5
        %v313 = vperm.slane %v305, 6
        %v314 = vperm.slane %v305, 7
        %v315 = vperm.slane %v306, 0
        %v316 = vperm.slane %v306, 1
        %v317 = vperm.slane %v306, 2
        %v318 = vperm.slane %v306, 3
        %v319 = vperm.slane %v306, 4
        %v320 = vperm.slane %v306, 5
        %v321 = vperm.slane %v306, 6
        %v322 = vperm.slane %v306, 7
        %v323 = vlaneseq
        %v324 = vshrl.u32 %v323, 7
        %v325 = vadd.s32 %v324, 8
        %v326 = vadd.s32 %v324, 16
        %v327 = vadd.s32 %v324, 24
        %v328 = vadd.s32 %v324, 32
        %v329 = vadd.s32 %v324, 40
        %v330 = vadd.s32 %v324, 48
        %v331 = vadd.s32 %v324, 56
        %v332 = vperm.slane %v307, 0
        %v333 = vperm.slane %v308, 0
        %v334 = vperm.slane %v309, 0
        %v335 = vperm.slane %v310, 0
        %v336 = vperm.slane %v311, 0
        %v337 = vperm.slane %v312, 0
        %v338 = vperm.slane %v313, 0
        %v339 = vperm.slane %v314, 0
        %v340 = vperm.slane %v315, 0
        %v341 = vperm.slane %v316, 0
        %v342 = vperm.slane %v317, 0
        %v343 = vperm.slane %v318, 0
        %v344 = vperm.slane %v319, 0
        %v345 = vperm.slane %v320, 0
        %v346 = vperm.slane %v321, 0
        %v347 = vperm.slane %v322, 0
        %vm348 = vcmp.eq.s32.totalorder %v324, %v332
        %vm349 = vcmp.eq.s32.totalorder %v324, %v333
        %vm350 = vcmp.eq.s32.totalorder %v324, %v334
        %vm351 = vcmp.eq.s32.totalorder %v324, %v335
        %vm352 = vcmp.eq.s32.totalorder %v324, %v336
        %vm353 = vcmp.eq.s32.totalorder %v324, %v337
        %vm354 = vcmp.eq.s32.totalorder %v324, %v338
        %vm355 = vcmp.eq.s32.totalorder %v324, %v339
        %vm356 = vcmp.eq.s32.totalorder %v324, %v340
        %vm357 = vcmp.eq.s32.totalorder %v324, %v341
        %vm358 = vcmp.eq.s32.totalorder %v324, %v342
        %vm359 = vcmp.eq.s32.totalorder %v324, %v343
        %vm360 = vcmp.eq.s32.totalorder %v324, %v344
        %vm361 = vcmp.eq.s32.totalorder %v324, %v345
        %vm362 = vcmp.eq.s32.totalorder %v324, %v346
        %vm363 = vcmp.eq.s32.totalorder %v324, %v347
        %vm364 = vcmp.eq.s32.totalorder %v325, %v332
        %vm365 = vcmp.eq.s32.totalorder %v325, %v333
        %vm366 = vcmp.eq.s32.totalorder %v325, %v334
        %vm367 = vcmp.eq.s32.totalorder %v325, %v335
        %vm368 = vcmp.eq.s32.totalorder %v325, %v336
        %vm369 = vcmp.eq.s32.totalorder %v325, %v337
        %vm370 = vcmp.eq.s32.totalorder %v325, %v338
        %vm371 = vcmp.eq.s32.totalorder %v325, %v339
        %vm372 = vcmp.eq.s32.totalorder %v325, %v340
        %vm373 = vcmp.eq.s32.totalorder %v325, %v341
        %vm374 = vcmp.eq.s32.totalorder %v325, %v342
        %vm375 = vcmp.eq.s32.totalorder %v325, %v343
        %vm376 = vcmp.eq.s32.totalorder %v325, %v344
        %vm377 = vcmp.eq.s32.totalorder %v325, %v345
        %vm378 = vcmp.eq.s32.totalorder %v325, %v346
        %vm379 = vcmp.eq.s32.totalorder %v325, %v347
        %vm380 = vcmp.eq.s32.totalorder %v326, %v332
        %vm381 = vcmp.eq.s32.totalorder %v326, %v333
        %vm382 = vcmp.eq.s32.totalorder %v326, %v334
        %vm383 = vcmp.eq.s32.totalorder %v326, %v335
        %vm384 = vcmp.eq.s32.totalorder %v326, %v336
        %vm385 = vcmp.eq.s32.totalorder %v326, %v337
        %vm386 = vcmp.eq.s32.totalorder %v326, %v338
        %vm387 = vcmp.eq.s32.totalorder %v326, %v339
        %vm388 = vcmp.eq.s32.totalorder %v326, %v340
        %vm389 = vcmp.eq.s32.totalorder %v326, %v341
        %vm390 = vcmp.eq.s32.totalorder %v326, %v342
        %vm391 = vcmp.eq.s32.totalorder %v326, %v343
        %vm392 = vcmp.eq.s32.totalorder %v326, %v344
        %vm393 = vcmp.eq.s32.totalorder %v326, %v345
        %vm394 = vcmp.eq.s32.totalorder %v326, %v346
        %vm395 = vcmp.eq.s32.totalorder %v326, %v347
        %vm396 = vcmp.eq.s32.totalorder %v327, %v332
        %vm397 = vcmp.eq.s32.totalorder %v327, %v333
        %vm398 = vcmp.eq.s32.totalorder %v327, %v334
        %vm399 = vcmp.eq.s32.totalorder %v327, %v335
        %vm400 = vcmp.eq.s32.totalorder %v327, %v336
        %vm401 = vcmp.eq.s32.totalorder %v327, %v337
        %vm402 = vcmp.eq.s32.totalorder %v327, %v338
        %vm403 = vcmp.eq.s32.totalorder %v327, %v339
        %vm404 = vcmp.eq.s32.totalorder %v327, %v340
        %vm405 = vcmp.eq.s32.totalorder %v327, %v341
        %vm406 = vcmp.eq.s32.totalorder %v327, %v342
        %vm407 = vcmp.eq.s32.totalorder %v327, %v343
        %vm408 = vcmp.eq.s32.totalorder %v327, %v344
        %vm409 = vcmp.eq.s32.totalorder %v327, %v345
        %vm410 = vcmp.eq.s32.totalorder %v327, %v346
        %vm411 = vcmp.eq.s32.totalorder %v327, %v347
        %vm412 = vcmp.eq.s32.totalorder %v328, %v332
        %vm413 = vcmp.eq.s32.totalorder %v328, %v333
        %vm414 = vcmp.eq.s32.totalorder %v328, %v334
        %vm415 = vcmp.eq.s32.totalorder %v328, %v335
        %vm416 = vcmp.eq.s32.totalorder %v328, %v336
        %vm417 = vcmp.eq.s32.totalorder %v328, %v337
        %vm418 = vcmp.eq.s32.totalorder %v328, %v338
        %vm419 = vcmp.eq.s32.totalorder %v328, %v339
        %vm420 = vcmp.eq.s32.totalorder %v328, %v340
        %vm421 = vcmp.eq.s32.totalorder %v328, %v341
        %vm422 = vcmp.eq.s32.totalorder %v328, %v342
        %vm423 = vcmp.eq.s32.totalorder %v328, %v343
        %vm424 = vcmp.eq.s32.totalorder %v328, %v344
        %vm425 = vcmp.eq.s32.totalorder %v328, %v345
        %vm426 = vcmp.eq.s32.totalorder %v328, %v346
        %vm427 = vcmp.eq.s32.totalorder %v328, %v347
        %vm428 = vcmp.eq.s32.totalorder %v329, %v332
        %vm429 = vcmp.eq.s32.totalorder %v329, %v333
        %vm430 = vcmp.eq.s32.totalorder %v329, %v334
        %vm431 = vcmp.eq.s32.totalorder %v329, %v335
        %vm432 = vcmp.eq.s32.totalorder %v329, %v336
        %vm433 = vcmp.eq.s32.totalorder %v329, %v337
        %vm434 = vcmp.eq.s32.totalorder %v329, %v338
        %vm435 = vcmp.eq.s32.totalorder %v329, %v339
        %vm436 = vcmp.eq.s32.totalorder %v329, %v340
        %vm437 = vcmp.eq.s32.totalorder %v329, %v341
        %vm438 = vcmp.eq.s32.totalorder %v329, %v342
        %vm439 = vcmp.eq.s32.totalorder %v329, %v343
        %vm440 = vcmp.eq.s32.totalorder %v329, %v344
        %vm441 = vcmp.eq.s32.totalorder %v329, %v345
        %vm442 = vcmp.eq.s32.totalorder %v329, %v346
        %vm443 = vcmp.eq.s32.totalorder %v329, %v347
        %vm444 = vcmp.eq.s32.totalorder %v330, %v332
        %vm445 = vcmp.eq.s32.totalorder %v330, %v333
        %vm446 = vcmp.eq.s32.totalorder %v330, %v334
        %vm447 = vcmp.eq.s32.totalorder %v330, %v335
        %vm448 = vcmp.eq.s32.totalorder %v330, %v336
        %vm449 = vcmp.eq.s32.totalorder %v330, %v337
        %vm450 = vcmp.eq.s32.totalorder %v330, %v338
        %vm451 = vcmp.eq.s32.totalorder %v330, %v339
        %vm452 = vcmp.eq.s32.totalorder %v330, %v340
        %vm453 = vcmp.eq.s32.totalorder %v330, %v341
        %vm454 = vcmp.eq.s32.totalorder %v330, %v342
        %vm455 = vcmp.eq.s32.totalorder %v330, %v343
        %vm456 = vcmp.eq.s32.totalorder %v330, %v344
        %vm457 = vcmp.eq.s32.totalorder %v330, %v345
        %vm458 = vcmp.eq.s32.totalorder %v330, %v346
        %vm459 = vcmp.eq.s32.totalorder %v330, %v347
        %vm460 = vcmp.eq.s32.totalorder %v331, %v332
        %vm461 = vcmp.eq.s32.totalorder %v331, %v333
        %vm462 = vcmp.eq.s32.totalorder %v331, %v334
        %vm463 = vcmp.eq.s32.totalorder %v331, %v335
        %vm464 = vcmp.eq.s32.totalorder %v331, %v336
        %vm465 = vcmp.eq.s32.totalorder %v331, %v337
        %vm466 = vcmp.eq.s32.totalorder %v331, %v338
        %vm467 = vcmp.eq.s32.totalorder %v331, %v339
        %vm468 = vcmp.eq.s32.totalorder %v331, %v340
        %vm469 = vcmp.eq.s32.totalorder %v331, %v341
        %vm470 = vcmp.eq.s32.totalorder %v331, %v342
        %vm471 = vcmp.eq.s32.totalorder %v331, %v343
        %vm472 = vcmp.eq.s32.totalorder %v331, %v344
        %vm473 = vcmp.eq.s32.totalorder %v331, %v345
        %vm474 = vcmp.eq.s32.totalorder %v331, %v346
        %vm475 = vcmp.eq.s32.totalorder %v331, %v347
        %v476 = vsel %vm348, 1, 0
        %v477 = vsel %vm349, 1, 0
        %v478 = vsel %vm350, 1, 0
        %v479 = vsel %vm351, 1, 0
        %v480 = vsel %vm352, 1, 0
        %v481 = vsel %vm353, 1, 0
        %v482 = vsel %vm354, 1, 0
        %v483 = vsel %vm355, 1, 0
        %v484 = vsel %vm356, 1, 0
        %v485 = vsel %vm357, 1, 0
        %v486 = vsel %vm358, 1, 0
        %v487 = vsel %vm359, 1, 0
        %v488 = vsel %vm360, 1, 0
        %v489 = vsel %vm361, 1, 0
        %v490 = vsel %vm362, 1, 0
        %v491 = vsel %vm363, 1, 0
        %v492 = vsel %vm364, 1, 0
        %v493 = vsel %vm365, 1, 0
        %v494 = vsel %vm366, 1, 0
        %v495 = vsel %vm367, 1, 0
        %v496 = vsel %vm368, 1, 0
        %v497 = vsel %vm369, 1, 0
        %v498 = vsel %vm370, 1, 0
        %v499 = vsel %vm371, 1, 0
        %v500 = vsel %vm372, 1, 0
        %v501 = vsel %vm373, 1, 0
        %v502 = vsel %vm374, 1, 0
        %v503 = vsel %vm375, 1, 0
        %v504 = vsel %vm376, 1, 0
        %v505 = vsel %vm377, 1, 0
        %v506 = vsel %vm378, 1, 0
        %v507 = vsel %vm379, 1, 0
        %v508 = vsel %vm380, 1, 0
        %v509 = vsel %vm381, 1, 0
        %v510 = vsel %vm382, 1, 0
        %v511 = vsel %vm383, 1, 0
        %v512 = vsel %vm384, 1, 0
        %v513 = vsel %vm385, 1, 0
        %v514 = vsel %vm386, 1, 0
        %v515 = vsel %vm387, 1, 0
        %v516 = vsel %vm388, 1, 0
        %v517 = vsel %vm389, 1, 0
        %v518 = vsel %vm390, 1, 0
        %v519 = vsel %vm391, 1, 0
        %v520 = vsel %vm392, 1, 0
        %v521 = vsel %vm393, 1, 0
        %v522 = vsel %vm394, 1, 0
        %v523 = vsel %vm395, 1, 0
        %v524 = vsel %vm396, 1, 0
        %v525 = vsel %vm397, 1, 0
        %v526 = vsel %vm398, 1, 0
        %v527 = vsel %vm399, 1, 0
        %v528 = vsel %vm400, 1, 0
        %v529 = vsel %vm401, 1, 0
        %v530 = vsel %vm402, 1, 0
        %v531 = vsel %vm403, 1, 0
        %v532 = vsel %vm404, 1, 0
        %v533 = vsel %vm405, 1, 0
        %v534 = vsel %vm406, 1, 0
        %v535 = vsel %vm407, 1, 0
        %v536 = vsel %vm408, 1, 0
        %v537 = vsel %vm409, 1, 0
        %v538 = vsel %vm410, 1, 0
        %v539 = vsel %vm411, 1, 0
        %v540 = vsel %vm412, 1, 0
        %v541 = vsel %vm413, 1, 0
        %v542 = vsel %vm414, 1, 0
        %v543 = vsel %vm415, 1, 0
        %v544 = vsel %vm416, 1, 0
        %v545 = vsel %vm417, 1, 0
        %v546 = vsel %vm418, 1, 0
        %v547 = vsel %vm419, 1, 0
        %v548 = vsel %vm420, 1, 0
        %v549 = vsel %vm421, 1, 0
        %v550 = vsel %vm422, 1, 0
        %v551 = vsel %vm423, 1, 0
        %v552 = vsel %vm424, 1, 0
        %v553 = vsel %vm425, 1, 0
        %v554 = vsel %vm426, 1, 0
        %v555 = vsel %vm427, 1, 0
        %v556 = vsel %vm428, 1, 0
        %v557 = vsel %vm429, 1, 0
        %v558 = vsel %vm430, 1, 0
        %v559 = vsel %vm431, 1, 0
        %v560 = vsel %vm432, 1, 0
        %v561 = vsel %vm433, 1, 0
        %v562 = vsel %vm434, 1, 0
        %v563 = vsel %vm435, 1, 0
        %v564 = vsel %vm436, 1, 0
        %v565 = vsel %vm437, 1, 0
        %v566 = vsel %vm438, 1, 0
        %v567 = vsel %vm439, 1, 0
        %v568 = vsel %vm440, 1, 0
        %v569 = vsel %vm441, 1, 0
        %v570 = vsel %vm442, 1, 0
        %v571 = vsel %vm443, 1, 0
        %v572 = vsel %vm444, 1, 0
        %v573 = vsel %vm445, 1, 0
        %v574 = vsel %vm446, 1, 0
        %v575 = vsel %vm447, 1, 0
        %v576 = vsel %vm448, 1, 0
        %v577 = vsel %vm449, 1, 0
        %v578 = vsel %vm450, 1, 0
        %v579 = vsel %vm451, 1, 0
        %v580 = vsel %vm452, 1, 0
        %v581 = vsel %vm453, 1, 0
        %v582 = vsel %vm454, 1, 0
        %v583 = vsel %vm455, 1, 0
        %v584 = vsel %vm456, 1, 0
        %v585 = vsel %vm457, 1, 0
        %v586 = vsel %vm458, 1, 0
        %v587 = vsel %vm459, 1, 0
        %v588 = vsel %vm460, 1, 0
        %v589 = vsel %vm461, 1, 0
        %v590 = vsel %vm462, 1, 0
        %v591 = vsel %vm463, 1, 0
        %v592 = vsel %vm464, 1, 0
        %v593 = vsel %vm465, 1, 0
        %v594 = vsel %vm466, 1, 0
        %v595 = vsel %vm467, 1, 0
        %v596 = vsel %vm468, 1, 0
        %v597 = vsel %vm469, 1, 0
        %v598 = vsel %vm470, 1, 0
        %v599 = vsel %vm471, 1, 0
        %v600 = vsel %vm472, 1, 0
        %v601 = vsel %vm473, 1, 0
        %v602 = vsel %vm474, 1, 0
        %v603 = vsel %vm475, 1, 0
        %v604 = vcvt.s32.f32 %v476
        %v605 = vcvt.s32.f32 %v477
        %v606 = vcvt.s32.f32 %v478
        %v607 = vcvt.s32.f32 %v479
        %v608 = vcvt.s32.f32 %v480
        %v609 = vcvt.s32.f32 %v481
        %v610 = vcvt.s32.f32 %v482
        %v611 = vcvt.s32.f32 %v483
        %v612 = vcvt.s32.f32 %v484
        %v613 = vcvt.s32.f32 %v485
        %v614 = vcvt.s32.f32 %v486
        %v615 = vcvt.s32.f32 %v487
        %v616 = vcvt.s32.f32 %v488
        %v617 = vcvt.s32.f32 %v489
        %v618 = vcvt.s32.f32 %v490
        %v619 = vcvt.s32.f32 %v491
        %v620 = vcvt.s32.f32 %v492
        %v621 = vcvt.s32.f32 %v493
        %v622 = vcvt.s32.f32 %v494
        %v623 = vcvt.s32.f32 %v495
        %v624 = vcvt.s32.f32 %v496
        %v625 = vcvt.s32.f32 %v497
        %v626 = vcvt.s32.f32 %v498
        %v627 = vcvt.s32.f32 %v499
        %v628 = vcvt.s32.f32 %v500
        %v629 = vcvt.s32.f32 %v501
        %v630 = vcvt.s32.f32 %v502
        %v631 = vcvt.s32.f32 %v503
        %v632 = vcvt.s32.f32 %v504
        %v633 = vcvt.s32.f32 %v505
        %v634 = vcvt.s32.f32 %v506
        %v635 = vcvt.s32.f32 %v507
        %v636 = vcvt.s32.f32 %v508
        %v637 = vcvt.s32.f32 %v509
        %v638 = vcvt.s32.f32 %v510
        %v639 = vcvt.s32.f32 %v511
        %v640 = vcvt.s32.f32 %v512
        %v641 = vcvt.s32.f32 %v513
        %v642 = vcvt.s32.f32 %v514
        %v643 = vcvt.s32.f32 %v515
        %v644 = vcvt.s32.f32 %v516
        %v645 = vcvt.s32.f32 %v517
        %v646 = vcvt.s32.f32 %v518
        %v647 = vcvt.s32.f32 %v519
        %v648 = vcvt.s32.f32 %v520
        %v649 = vcvt.s32.f32 %v521
        %v650 = vcvt.s32.f32 %v522
        %v651 = vcvt.s32.f32 %v523
        %v652 = vcvt.s32.f32 %v524
        %v653 = vcvt.s32.f32 %v525
        %v654 = vcvt.s32.f32 %v526
        %v655 = vcvt.s32.f32 %v527
        %v656 = vcvt.s32.f32 %v528
        %v657 = vcvt.s32.f32 %v529
        %v658 = vcvt.s32.f32 %v530
        %v659 = vcvt.s32.f32 %v531
        %v660 = vcvt.s32.f32 %v532
        %v661 = vcvt.s32.f32 %v533
        %v662 = vcvt.s32.f32 %v534
        %v663 = vcvt.s32.f32 %v535
        %v664 = vcvt.s32.f32 %v536
        %v665 = vcvt.s32.f32 %v537
        %v666 = vcvt.s32.f32 %v538
        %v667 = vcvt.s32.f32 %v539
        %v668 = vcvt.s32.f32 %v540
        %v669 = vcvt.s32.f32 %v541
        %v670 = vcvt.s32.f32 %v542
        %v671 = vcvt.s32.f32 %v543
        %v672 = vcvt.s32.f32 %v544
        %v673 = vcvt.s32.f32 %v545
        %v674 = vcvt.s32.f32 %v546
        %v675 = vcvt.s32.f32 %v547
        %v676 = vcvt.s32.f32 %v548
        %v677 = vcvt.s32.f32 %v549
        %v678 = vcvt.s32.f32 %v550
        %v679 = vcvt.s32.f32 %v551
        %v680 = vcvt.s32.f32 %v552
        %v681 = vcvt.s32.f32 %v553
        %v682 = vcvt.s32.f32 %v554
        %v683 = vcvt.s32.f32 %v555
        %v684 = vcvt.s32.f32 %v556
        %v685 = vcvt.s32.f32 %v557
        %v686 = vcvt.s32.f32 %v558
        %v687 = vcvt.s32.f32 %v559
        %v688 = vcvt.s32.f32 %v560
        %v689 = vcvt.s32.f32 %v561
        %v690 = vcvt.s32.f32 %v562
        %v691 = vcvt.s32.f32 %v563
        %v692 = vcvt.s32.f32 %v564
        %v693 = vcvt.s32.f32 %v565
        %v694 = vcvt.s32.f32 %v566
        %v695 = vcvt.s32.f32 %v567
        %v696 = vcvt.s32.f32 %v568
        %v697 = vcvt.s32.f32 %v569
        %v698 = vcvt.s32.f32 %v570
        %v699 = vcvt.s32.f32 %v571
        %v700 = vcvt.s32.f32 %v572
        %v701 = vcvt.s32.f32 %v573
        %v702 = vcvt.s32.f32 %v574
        %v703 = vcvt.s32.f32 %v575
        %v704 = vcvt.s32.f32 %v576
        %v705 = vcvt.s32.f32 %v577
        %v706 = vcvt.s32.f32 %v578
        %v707 = vcvt.s32.f32 %v579
        %v708 = vcvt.s32.f32 %v580
        %v709 = vcvt.s32.f32 %v581
        %v710 = vcvt.s32.f32 %v582
        %v711 = vcvt.s32.f32 %v583
        %v712 = vcvt.s32.f32 %v584
        %v713 = vcvt.s32.f32 %v585
        %v714 = vcvt.s32.f32 %v586
        %v715 = vcvt.s32.f32 %v587
        %v716 = vcvt.s32.f32 %v588
        %v717 = vcvt.s32.f32 %v589
        %v718 = vcvt.s32.f32 %v590
        %v719 = vcvt.s32.f32 %v591
        %v720 = vcvt.s32.f32 %v592
        %v721 = vcvt.s32.f32 %v593
        %v722 = vcvt.s32.f32 %v594
        %v723 = vcvt.s32.f32 %v595
        %v724 = vcvt.s32.f32 %v596
        %v725 = vcvt.s32.f32 %v597
        %v726 = vcvt.s32.f32 %v598
        %v727 = vcvt.s32.f32 %v599
        %v728 = vcvt.s32.f32 %v600
        %v729 = vcvt.s32.f32 %v601
        %v730 = vcvt.s32.f32 %v602
        %v731 = vcvt.s32.f32 %v603
        %v732 = vld [vmem:[%s2] sm:$0xff]
        %v733 = vld [vmem:[%s2 + $0x8] sm:$0xff]
        %v734 = vld [vmem:[%s2 + $0x10] sm:$0xff]
        %v735 = vld [vmem:[%s2 + $0x18] sm:$0xff]
        %vm736 = vcmask 523264
        %v738 = vsel %vm736, %v732, 0
        %v741 = vsel %vm736, %v733, 0
        %v744 = vsel %vm736, %v734, 0
        %v747 = vsel %vm736, %v735, 0
        %749 = vmatpush.msra.mxu0 0.0
        %750 = vmatpush.msra.mxu0 0.0
        %751 = vmatpush.msra.mxu0 0.0
        %752 = vmatpush.msra.mxu0 0.0
        %753 = vmatpush.msra.mxu0 0.0
        %754 = vmatpush.msra.mxu0 0.0
        %755 = vmatpush.msra.mxu0 0.0
        %756 = vmatpush.msra.mxu0 0.0
        %757 = vmatpush.msra.mxu0 %v716
        %758 = vmatpush.msra.mxu0 %v700
        %759 = vmatpush.msra.mxu0 %v684
        %760 = vmatpush.msra.mxu0 %v668
        %761 = vmatpush.msra.mxu0 %v652
        %762 = vmatpush.msra.mxu0 %v636
        %763 = vmatpush.msra.mxu0 %v620
        %764 = vmatpush.msra.mxu0 %v604
        %765 = vmatmul.f32.gmra.mxu0 %v738
        %v766 = vpop.f32.mrf.mxu0
        %v767 = vadd.f32 0.0, %v766
        %768 = vmatmul.f32.gmra.mxu0 %v741
        %v769 = vpop.f32.mrf.mxu0
        %v770 = vadd.f32 0.0, %v769
        %771 = vmatmul.f32.gmra.mxu0 %v744
        %v772 = vpop.f32.mrf.mxu0
        %v773 = vadd.f32 0.0, %v772
        %774 = vmatmul.f32.gmra.mxu0 %v747
        %v775 = vpop.f32.mrf.mxu0
        %v776 = vadd.f32 0.0, %v775
        %777 = vdwg.mxu0
        %778 = vmatpush.msra.mxu0 0.0
        %779 = vmatpush.msra.mxu0 0.0
        %780 = vmatpush.msra.mxu0 0.0
        %781 = vmatpush.msra.mxu0 0.0
        %782 = vmatpush.msra.mxu0 0.0
        %783 = vmatpush.msra.mxu0 0.0
        %784 = vmatpush.msra.mxu0 0.0
        %785 = vmatpush.msra.mxu0 0.0
        %786 = vmatpush.msra.mxu0 %v717
        %787 = vmatpush.msra.mxu0 %v701
        %788 = vmatpush.msra.mxu0 %v685
        %789 = vmatpush.msra.mxu0 %v669
        %790 = vmatpush.msra.mxu0 %v653
        %791 = vmatpush.msra.mxu0 %v637
        %792 = vmatpush.msra.mxu0 %v621
        %793 = vmatpush.msra.mxu0 %v605
        %794 = vmatmul.f32.gmra.mxu0 %v738
        %v795 = vpop.f32.mrf.mxu0
        %v796 = vadd.f32 0.0, %v795
        %797 = vmatmul.f32.gmra.mxu0 %v741
        %v798 = vpop.f32.mrf.mxu0
        %v799 = vadd.f32 0.0, %v798
        %800 = vmatmul.f32.gmra.mxu0 %v744
        %v801 = vpop.f32.mrf.mxu0
        %v802 = vadd.f32 0.0, %v801
        %803 = vmatmul.f32.gmra.mxu0 %v747
        %v804 = vpop.f32.mrf.mxu0
        %v805 = vadd.f32 0.0, %v804
        %806 = vdwg.mxu0
        %807 = vmatpush.msra.mxu0 0.0
        %808 = vmatpush.msra.mxu0 0.0
        %809 = vmatpush.msra.mxu0 0.0
        %810 = vmatpush.msra.mxu0 0.0
        %811 = vmatpush.msra.mxu0 0.0
        %812 = vmatpush.msra.mxu0 0.0
        %813 = vmatpush.msra.mxu0 0.0
        %814 = vmatpush.msra.mxu0 0.0
        %815 = vmatpush.msra.mxu0 %v718
        %816 = vmatpush.msra.mxu0 %v702
        %817 = vmatpush.msra.mxu0 %v686
        %818 = vmatpush.msra.mxu0 %v670
        %819 = vmatpush.msra.mxu0 %v654
        %820 = vmatpush.msra.mxu0 %v638
        %821 = vmatpush.msra.mxu0 %v622
        %822 = vmatpush.msra.mxu0 %v606
        %823 = vmatmul.f32.gmra.mxu0 %v738
        %v824 = vpop.f32.mrf.mxu0
        %v825 = vadd.f32 0.0, %v824
        %826 = vmatmul.f32.gmra.mxu0 %v741
        %v827 = vpop.f32.mrf.mxu0
        %v828 = vadd.f32 0.0, %v827
        %829 = vmatmul.f32.gmra.mxu0 %v744
        %v830 = vpop.f32.mrf.mxu0
        %v831 = vadd.f32 0.0, %v830
        %832 = vmatmul.f32.gmra.mxu0 %v747
        %v833 = vpop.f32.mrf.mxu0
        %v834 = vadd.f32 0.0, %v833
        %835 = vdwg.mxu0
        %836 = vmatpush.msra.mxu0 0.0
        %837 = vmatpush.msra.mxu0 0.0
        %838 = vmatpush.msra.mxu0 0.0
        %839 = vmatpush.msra.mxu0 0.0
        %840 = vmatpush.msra.mxu0 0.0
        %841 = vmatpush.msra.mxu0 0.0
        %842 = vmatpush.msra.mxu0 0.0
        %843 = vmatpush.msra.mxu0 0.0
        %844 = vmatpush.msra.mxu0 %v719
        %845 = vmatpush.msra.mxu0 %v703
        %846 = vmatpush.msra.mxu0 %v687
        %847 = vmatpush.msra.mxu0 %v671
        %848 = vmatpush.msra.mxu0 %v655
        %849 = vmatpush.msra.mxu0 %v639
        %850 = vmatpush.msra.mxu0 %v623
        %851 = vmatpush.msra.mxu0 %v607
        %852 = vmatmul.f32.gmra.mxu0 %v738
        %v853 = vpop.f32.mrf.mxu0
        %v854 = vadd.f32 0.0, %v853
        %855 = vmatmul.f32.gmra.mxu0 %v741
        %v856 = vpop.f32.mrf.mxu0
        %v857 = vadd.f32 0.0, %v856
        %858 = vmatmul.f32.gmra.mxu0 %v744
        %v859 = vpop.f32.mrf.mxu0
        %v860 = vadd.f32 0.0, %v859
        %861 = vmatmul.f32.gmra.mxu0 %v747
        %v862 = vpop.f32.mrf.mxu0
        %v863 = vadd.f32 0.0, %v862
        %864 = vdwg.mxu0
        %865 = vmatpush.msra.mxu0 0.0
        %866 = vmatpush.msra.mxu0 0.0
        %867 = vmatpush.msra.mxu0 0.0
        %868 = vmatpush.msra.mxu0 0.0
        %869 = vmatpush.msra.mxu0 0.0
        %870 = vmatpush.msra.mxu0 0.0
        %871 = vmatpush.msra.mxu0 0.0
        %872 = vmatpush.msra.mxu0 0.0
        %873 = vmatpush.msra.mxu0 %v720
        %874 = vmatpush.msra.mxu0 %v704
        %875 = vmatpush.msra.mxu0 %v688
        %876 = vmatpush.msra.mxu0 %v672
        %877 = vmatpush.msra.mxu0 %v656
        %878 = vmatpush.msra.mxu0 %v640
        %879 = vmatpush.msra.mxu0 %v624
        %880 = vmatpush.msra.mxu0 %v608
        %881 = vmatmul.f32.gmra.mxu0 %v738
        %v882 = vpop.f32.mrf.mxu0
        %v883 = vadd.f32 0.0, %v882
        %884 = vmatmul.f32.gmra.mxu0 %v741
        %v885 = vpop.f32.mrf.mxu0
        %v886 = vadd.f32 0.0, %v885
        %887 = vmatmul.f32.gmra.mxu0 %v744
        %v888 = vpop.f32.mrf.mxu0
        %v889 = vadd.f32 0.0, %v888
        %890 = vmatmul.f32.gmra.mxu0 %v747
        %v891 = vpop.f32.mrf.mxu0
        %v892 = vadd.f32 0.0, %v891
        %893 = vdwg.mxu0
        %894 = vmatpush.msra.mxu0 0.0
        %895 = vmatpush.msra.mxu0 0.0
        %896 = vmatpush.msra.mxu0 0.0
        %897 = vmatpush.msra.mxu0 0.0
        %898 = vmatpush.msra.mxu0 0.0
        %899 = vmatpush.msra.mxu0 0.0
        %900 = vmatpush.msra.mxu0 0.0
        %901 = vmatpush.msra.mxu0 0.0
        %902 = vmatpush.msra.mxu0 %v721
        %903 = vmatpush.msra.mxu0 %v705
        %904 = vmatpush.msra.mxu0 %v689
        %905 = vmatpush.msra.mxu0 %v673
        %906 = vmatpush.msra.mxu0 %v657
        %907 = vmatpush.msra.mxu0 %v641
        %908 = vmatpush.msra.mxu0 %v625
        %909 = vmatpush.msra.mxu0 %v609
        %910 = vmatmul.f32.gmra.mxu0 %v738
        %v911 = vpop.f32.mrf.mxu0
        %v912 = vadd.f32 0.0, %v911
        %913 = vmatmul.f32.gmra.mxu0 %v741
        %v914 = vpop.f32.mrf.mxu0
        %v915 = vadd.f32 0.0, %v914
        %916 = vmatmul.f32.gmra.mxu0 %v744
        %v917 = vpop.f32.mrf.mxu0
        %v918 = vadd.f32 0.0, %v917
        %919 = vmatmul.f32.gmra.mxu0 %v747
        %v920 = vpop.f32.mrf.mxu0
        %v921 = vadd.f32 0.0, %v920
        %922 = vdwg.mxu0
        %923 = vmatpush.msra.mxu0 0.0
        %924 = vmatpush.msra.mxu0 0.0
        %925 = vmatpush.msra.mxu0 0.0
        %926 = vmatpush.msra.mxu0 0.0
        %927 = vmatpush.msra.mxu0 0.0
        %928 = vmatpush.msra.mxu0 0.0
        %929 = vmatpush.msra.mxu0 0.0
        %930 = vmatpush.msra.mxu0 0.0
        %931 = vmatpush.msra.mxu0 %v722
        %932 = vmatpush.msra.mxu0 %v706
        %933 = vmatpush.msra.mxu0 %v690
        %934 = vmatpush.msra.mxu0 %v674
        %935 = vmatpush.msra.mxu0 %v658
        %936 = vmatpush.msra.mxu0 %v642
        %937 = vmatpush.msra.mxu0 %v626
        %938 = vmatpush.msra.mxu0 %v610
        %939 = vmatmul.f32.gmra.mxu0 %v738
        %v940 = vpop.f32.mrf.mxu0
        %v941 = vadd.f32 0.0, %v940
        %942 = vmatmul.f32.gmra.mxu0 %v741
        %v943 = vpop.f32.mrf.mxu0
        %v944 = vadd.f32 0.0, %v943
        %945 = vmatmul.f32.gmra.mxu0 %v744
        %v946 = vpop.f32.mrf.mxu0
        %v947 = vadd.f32 0.0, %v946
        %948 = vmatmul.f32.gmra.mxu0 %v747
        %v949 = vpop.f32.mrf.mxu0
        %v950 = vadd.f32 0.0, %v949
        %951 = vdwg.mxu0
        %952 = vmatpush.msra.mxu0 0.0
        %953 = vmatpush.msra.mxu0 0.0
        %954 = vmatpush.msra.mxu0 0.0
        %955 = vmatpush.msra.mxu0 0.0
        %956 = vmatpush.msra.mxu0 0.0
        %957 = vmatpush.msra.mxu0 0.0
        %958 = vmatpush.msra.mxu0 0.0
        %959 = vmatpush.msra.mxu0 0.0
        %960 = vmatpush.msra.mxu0 %v723
        %961 = vmatpush.msra.mxu0 %v707
        %962 = vmatpush.msra.mxu0 %v691
        %963 = vmatpush.msra.mxu0 %v675
        %964 = vmatpush.msra.mxu0 %v659
        %965 = vmatpush.msra.mxu0 %v643
        %966 = vmatpush.msra.mxu0 %v627
        %967 = vmatpush.msra.mxu0 %v611
        %968 = vmatmul.f32.gmra.mxu0 %v738
        %v969 = vpop.f32.mrf.mxu0
        %v970 = vadd.f32 0.0, %v969
        %971 = vmatmul.f32.gmra.mxu0 %v741
        %v972 = vpop.f32.mrf.mxu0
        %v973 = vadd.f32 0.0, %v972
        %974 = vmatmul.f32.gmra.mxu0 %v744
        %v975 = vpop.f32.mrf.mxu0
        %v976 = vadd.f32 0.0, %v975
        %977 = vmatmul.f32.gmra.mxu0 %v747
        %v978 = vpop.f32.mrf.mxu0
        %v979 = vadd.f32 0.0, %v978
        %980 = vdwg.mxu0
        %981 = vmatpush.msra.mxu0 0.0
        %982 = vmatpush.msra.mxu0 0.0
        %983 = vmatpush.msra.mxu0 0.0
        %984 = vmatpush.msra.mxu0 0.0
        %985 = vmatpush.msra.mxu0 0.0
        %986 = vmatpush.msra.mxu0 0.0
        %987 = vmatpush.msra.mxu0 0.0
        %988 = vmatpush.msra.mxu0 0.0
        %989 = vmatpush.msra.mxu0 %v724
        %990 = vmatpush.msra.mxu0 %v708
        %991 = vmatpush.msra.mxu0 %v692
        %992 = vmatpush.msra.mxu0 %v676
        %993 = vmatpush.msra.mxu0 %v660
        %994 = vmatpush.msra.mxu0 %v644
        %995 = vmatpush.msra.mxu0 %v628
        %996 = vmatpush.msra.mxu0 %v612
        %997 = vmatmul.f32.gmra.mxu0 %v738
        %v998 = vpop.f32.mrf.mxu0
        %v999 = vadd.f32 0.0, %v998
        %1000 = vmatmul.f32.gmra.mxu0 %v741
        %v1001 = vpop.f32.mrf.mxu0
        %v1002 = vadd.f32 0.0, %v1001
        %1003 = vmatmul.f32.gmra.mxu0 %v744
        %v1004 = vpop.f32.mrf.mxu0
        %v1005 = vadd.f32 0.0, %v1004
        %1006 = vmatmul.f32.gmra.mxu0 %v747
        %v1007 = vpop.f32.mrf.mxu0
        %v1008 = vadd.f32 0.0, %v1007
        %1009 = vdwg.mxu0
        %1010 = vmatpush.msra.mxu0 0.0
        %1011 = vmatpush.msra.mxu0 0.0
        %1012 = vmatpush.msra.mxu0 0.0
        %1013 = vmatpush.msra.mxu0 0.0
        %1014 = vmatpush.msra.mxu0 0.0
        %1015 = vmatpush.msra.mxu0 0.0
        %1016 = vmatpush.msra.mxu0 0.0
        %1017 = vmatpush.msra.mxu0 0.0
        %1018 = vmatpush.msra.mxu0 %v725
        %1019 = vmatpush.msra.mxu0 %v709
        %1020 = vmatpush.msra.mxu0 %v693
        %1021 = vmatpush.msra.mxu0 %v677
        %1022 = vmatpush.msra.mxu0 %v661
        %1023 = vmatpush.msra.mxu0 %v645
        %1024 = vmatpush.msra.mxu0 %v629
        %1025 = vmatpush.msra.mxu0 %v613
        %1026 = vmatmul.f32.gmra.mxu0 %v738
        %v1027 = vpop.f32.mrf.mxu0
        %v1028 = vadd.f32 0.0, %v1027
        %1029 = vmatmul.f32.gmra.mxu0 %v741
        %v1030 = vpop.f32.mrf.mxu0
        %v1031 = vadd.f32 0.0, %v1030
        %1032 = vmatmul.f32.gmra.mxu0 %v744
        %v1033 = vpop.f32.mrf.mxu0
        %v1034 = vadd.f32 0.0, %v1033
        %1035 = vmatmul.f32.gmra.mxu0 %v747
        %v1036 = vpop.f32.mrf.mxu0
        %v1037 = vadd.f32 0.0, %v1036
        %1038 = vdwg.mxu0
        %1039 = vmatpush.msra.mxu0 0.0
        %1040 = vmatpush.msra.mxu0 0.0
        %1041 = vmatpush.msra.mxu0 0.0
        %1042 = vmatpush.msra.mxu0 0.0
        %1043 = vmatpush.msra.mxu0 0.0
        %1044 = vmatpush.msra.mxu0 0.0
        %1045 = vmatpush.msra.mxu0 0.0
        %1046 = vmatpush.msra.mxu0 0.0
        %1047 = vmatpush.msra.mxu0 %v726
        %1048 = vmatpush.msra.mxu0 %v710
        %1049 = vmatpush.msra.mxu0 %v694
        %1050 = vmatpush.msra.mxu0 %v678
        %1051 = vmatpush.msra.mxu0 %v662
        %1052 = vmatpush.msra.mxu0 %v646
        %1053 = vmatpush.msra.mxu0 %v630
        %1054 = vmatpush.msra.mxu0 %v614
        %1055 = vmatmul.f32.gmra.mxu0 %v738
        %v1056 = vpop.f32.mrf.mxu0
        %v1057 = vadd.f32 0.0, %v1056
        %1058 = vmatmul.f32.gmra.mxu0 %v741
        %v1059 = vpop.f32.mrf.mxu0
        %v1060 = vadd.f32 0.0, %v1059
        %1061 = vmatmul.f32.gmra.mxu0 %v744
        %v1062 = vpop.f32.mrf.mxu0
        %v1063 = vadd.f32 0.0, %v1062
        %1064 = vmatmul.f32.gmra.mxu0 %v747
        %v1065 = vpop.f32.mrf.mxu0
        %v1066 = vadd.f32 0.0, %v1065
        %1067 = vdwg.mxu0
        %1068 = vmatpush.msra.mxu0 0.0
        %1069 = vmatpush.msra.mxu0 0.0
        %1070 = vmatpush.msra.mxu0 0.0
        %1071 = vmatpush.msra.mxu0 0.0
        %1072 = vmatpush.msra.mxu0 0.0
        %1073 = vmatpush.msra.mxu0 0.0
        %1074 = vmatpush.msra.mxu0 0.0
        %1075 = vmatpush.msra.mxu0 0.0
        %1076 = vmatpush.msra.mxu0 %v727
        %1077 = vmatpush.msra.mxu0 %v711
        %1078 = vmatpush.msra.mxu0 %v695
        %1079 = vmatpush.msra.mxu0 %v679
        %1080 = vmatpush.msra.mxu0 %v663
        %1081 = vmatpush.msra.mxu0 %v647
        %1082 = vmatpush.msra.mxu0 %v631
        %1083 = vmatpush.msra.mxu0 %v615
        %1084 = vmatmul.f32.gmra.mxu0 %v738
        %v1085 = vpop.f32.mrf.mxu0
        %v1086 = vadd.f32 0.0, %v1085
        %1087 = vmatmul.f32.gmra.mxu0 %v741
        %v1088 = vpop.f32.mrf.mxu0
        %v1089 = vadd.f32 0.0, %v1088
        %1090 = vmatmul.f32.gmra.mxu0 %v744
        %v1091 = vpop.f32.mrf.mxu0
        %v1092 = vadd.f32 0.0, %v1091
        %1093 = vmatmul.f32.gmra.mxu0 %v747
        %v1094 = vpop.f32.mrf.mxu0
        %v1095 = vadd.f32 0.0, %v1094
        %1096 = vdwg.mxu0
        %1097 = vmatpush.msra.mxu0 0.0
        %1098 = vmatpush.msra.mxu0 0.0
        %1099 = vmatpush.msra.mxu0 0.0
        %1100 = vmatpush.msra.mxu0 0.0
        %1101 = vmatpush.msra.mxu0 0.0
        %1102 = vmatpush.msra.mxu0 0.0
        %1103 = vmatpush.msra.mxu0 0.0
        %1104 = vmatpush.msra.mxu0 0.0
        %1105 = vmatpush.msra.mxu0 %v728
        %1106 = vmatpush.msra.mxu0 %v712
        %1107 = vmatpush.msra.mxu0 %v696
        %1108 = vmatpush.msra.mxu0 %v680
        %1109 = vmatpush.msra.mxu0 %v664
        %1110 = vmatpush.msra.mxu0 %v648
        %1111 = vmatpush.msra.mxu0 %v632
        %1112 = vmatpush.msra.mxu0 %v616
        %1113 = vmatmul.f32.gmra.mxu0 %v738
        %v1114 = vpop.f32.mrf.mxu0
        %v1115 = vadd.f32 0.0, %v1114
        %1116 = vmatmul.f32.gmra.mxu0 %v741
        %v1117 = vpop.f32.mrf.mxu0
        %v1118 = vadd.f32 0.0, %v1117
        %1119 = vmatmul.f32.gmra.mxu0 %v744
        %v1120 = vpop.f32.mrf.mxu0
        %v1121 = vadd.f32 0.0, %v1120
        %1122 = vmatmul.f32.gmra.mxu0 %v747
        %v1123 = vpop.f32.mrf.mxu0
        %v1124 = vadd.f32 0.0, %v1123
        %1125 = vdwg.mxu0
        %1126 = vmatpush.msra.mxu0 0.0
        %1127 = vmatpush.msra.mxu0 0.0
        %1128 = vmatpush.msra.mxu0 0.0
        %1129 = vmatpush.msra.mxu0 0.0
        %1130 = vmatpush.msra.mxu0 0.0
        %1131 = vmatpush.msra.mxu0 0.0
        %1132 = vmatpush.msra.mxu0 0.0
        %1133 = vmatpush.msra.mxu0 0.0
        %1134 = vmatpush.msra.mxu0 %v729
        %1135 = vmatpush.msra.mxu0 %v713
        %1136 = vmatpush.msra.mxu0 %v697
        %1137 = vmatpush.msra.mxu0 %v681
        %1138 = vmatpush.msra.mxu0 %v665
        %1139 = vmatpush.msra.mxu0 %v649
        %1140 = vmatpush.msra.mxu0 %v633
        %1141 = vmatpush.msra.mxu0 %v617
        %1142 = vmatmul.f32.gmra.mxu0 %v738
        %v1143 = vpop.f32.mrf.mxu0
        %v1144 = vadd.f32 0.0, %v1143
        %1145 = vmatmul.f32.gmra.mxu0 %v741
        %v1146 = vpop.f32.mrf.mxu0
        %v1147 = vadd.f32 0.0, %v1146
        %1148 = vmatmul.f32.gmra.mxu0 %v744
        %v1149 = vpop.f32.mrf.mxu0
        %v1150 = vadd.f32 0.0, %v1149
        %1151 = vmatmul.f32.gmra.mxu0 %v747
        %v1152 = vpop.f32.mrf.mxu0
        %v1153 = vadd.f32 0.0, %v1152
        %1154 = vdwg.mxu0
        %1155 = vmatpush.msra.mxu0 0.0
        %1156 = vmatpush.msra.mxu0 0.0
        %1157 = vmatpush.msra.mxu0 0.0
        %1158 = vmatpush.msra.mxu0 0.0
        %1159 = vmatpush.msra.mxu0 0.0
        %1160 = vmatpush.msra.mxu0 0.0
        %1161 = vmatpush.msra.mxu0 0.0
        %1162 = vmatpush.msra.mxu0 0.0
        %1163 = vmatpush.msra.mxu0 %v730
        %1164 = vmatpush.msra.mxu0 %v714
        %1165 = vmatpush.msra.mxu0 %v698
        %1166 = vmatpush.msra.mxu0 %v682
        %1167 = vmatpush.msra.mxu0 %v666
        %1168 = vmatpush.msra.mxu0 %v650
        %1169 = vmatpush.msra.mxu0 %v634
        %1170 = vmatpush.msra.mxu0 %v618
        %1171 = vmatmul.f32.gmra.mxu0 %v738
        %v1172 = vpop.f32.mrf.mxu0
        %v1173 = vadd.f32 0.0, %v1172
        %1174 = vmatmul.f32.gmra.mxu0 %v741
        %v1175 = vpop.f32.mrf.mxu0
        %v1176 = vadd.f32 0.0, %v1175
        %1177 = vmatmul.f32.gmra.mxu0 %v744
        %v1178 = vpop.f32.mrf.mxu0
        %v1179 = vadd.f32 0.0, %v1178
        %1180 = vmatmul.f32.gmra.mxu0 %v747
        %v1181 = vpop.f32.mrf.mxu0
        %v1182 = vadd.f32 0.0, %v1181
        %1183 = vdwg.mxu0
        %1184 = vmatpush.msra.mxu0 0.0
        %1185 = vmatpush.msra.mxu0 0.0
        %1186 = vmatpush.msra.mxu0 0.0
        %1187 = vmatpush.msra.mxu0 0.0
        %1188 = vmatpush.msra.mxu0 0.0
        %1189 = vmatpush.msra.mxu0 0.0
        %1190 = vmatpush.msra.mxu0 0.0
        %1191 = vmatpush.msra.mxu0 0.0
        %1192 = vmatpush.msra.mxu0 %v731
        %1193 = vmatpush.msra.mxu0 %v715
        %1194 = vmatpush.msra.mxu0 %v699
        %1195 = vmatpush.msra.mxu0 %v683
        %1196 = vmatpush.msra.mxu0 %v667
        %1197 = vmatpush.msra.mxu0 %v651
        %1198 = vmatpush.msra.mxu0 %v635
        %1199 = vmatpush.msra.mxu0 %v619
        %1200 = vmatmul.f32.gmra.mxu0 %v738
        %v1201 = vpop.f32.mrf.mxu0
        %v1202 = vadd.f32 0.0, %v1201
        %1203 = vmatmul.f32.gmra.mxu0 %v741
        %v1204 = vpop.f32.mrf.mxu0
        %v1205 = vadd.f32 0.0, %v1204
        %1206 = vmatmul.f32.gmra.mxu0 %v744
        %v1207 = vpop.f32.mrf.mxu0
        %v1208 = vadd.f32 0.0, %v1207
        %1209 = vmatmul.f32.gmra.mxu0 %v747
        %v1210 = vpop.f32.mrf.mxu0
        %v1211 = vadd.f32 0.0, %v1210
        %1212 = vdwg.mxu0
        %v1213 = vmul.f32 %v767, %v999
        %v1214 = vmul.f32 %v796, %v1028
        %v1215 = vmul.f32 %v825, %v1057
        %v1216 = vmul.f32 %v854, %v1086
        %v1217 = vmul.f32 %v883, %v1115
        %v1218 = vmul.f32 %v912, %v1144
        %v1219 = vmul.f32 %v941, %v1173
        %v1220 = vmul.f32 %v970, %v1202
        %v1221 = vmul.f32 %v770, %v1002
        %v1222 = vmul.f32 %v799, %v1031
        %v1223 = vmul.f32 %v828, %v1060
        %v1224 = vmul.f32 %v857, %v1089
        %v1225 = vmul.f32 %v886, %v1118
        %v1226 = vmul.f32 %v915, %v1147
        %v1227 = vmul.f32 %v944, %v1176
        %v1228 = vmul.f32 %v973, %v1205
        %v1229 = vmul.f32 %v773, %v1005
        %v1230 = vmul.f32 %v802, %v1034
        %v1231 = vmul.f32 %v831, %v1063
        %v1232 = vmul.f32 %v860, %v1092
        %v1233 = vmul.f32 %v889, %v1121
        %v1234 = vmul.f32 %v918, %v1150
        %v1235 = vmul.f32 %v947, %v1179
        %v1236 = vmul.f32 %v976, %v1208
        %v1237 = vmul.f32 %v776, %v1008
        %v1238 = vmul.f32 %v805, %v1037
        %v1239 = vmul.f32 %v834, %v1066
        %v1240 = vmul.f32 %v863, %v1095
        %v1241 = vmul.f32 %v892, %v1124
        %v1242 = vmul.f32 %v921, %v1153
        %v1243 = vmul.f32 %v950, %v1182
        %v1244 = vmul.f32 %v979, %v1211
        %v1245 = vld [vmem:[#allocation2] sm:$0xff]
        %v1246 = vld [vmem:[#allocation2 + $0x8] sm:$0xff]
        %v1247 = vld [vmem:[#allocation2 + $0x10] sm:$0xff]
        %v1248 = vld [vmem:[#allocation2 + $0x18] sm:$0xff]
        %vm1249 = vcmask 261120
        %v1251 = vsel %vm1249, %v1245, 0
        %v1254 = vsel %vm1249, %v1246, 0
        %v1257 = vsel %vm1249, %v1247, 0
        %v1260 = vsel %vm1249, %v1248, 0
        %1262 = vmatpush.msra.mxu0 0.0
        %1263 = vmatpush.msra.mxu0 0.0
        %1264 = vmatpush.msra.mxu0 0.0
        %1265 = vmatpush.msra.mxu0 0.0
        %1266 = vmatpush.msra.mxu0 0.0
        %1267 = vmatpush.msra.mxu0 0.0
        %1268 = vmatpush.msra.mxu0 0.0
        %1269 = vmatpush.msra.mxu0 0.0
        %1270 = vmatpush.msra.mxu0 0.0
        %1271 = vmatpush.msra.mxu0 0.0
        %1272 = vmatpush.msra.mxu0 0.0
        %1273 = vmatpush.msra.mxu0 0.0
        %1274 = vmatpush.msra.mxu0 %v1237
        %1275 = vmatpush.msra.mxu0 %v1229
        %1276 = vmatpush.msra.mxu0 %v1221
        %1277 = vmatpush.msra.mxu0 %v1213
        %1278 = vmatmul.f32.gmra.mxu0 %v1251
        %v1279 = vpop.f32.mrf.mxu0
        %v1280 = vadd.f32 0.0, %v1279
        %1281 = vmatmul.f32.gmra.mxu0 %v1254
        %v1282 = vpop.f32.mrf.mxu0
        %v1283 = vadd.f32 0.0, %v1282
        %1284 = vmatmul.f32.gmra.mxu0 %v1257
        %v1285 = vpop.f32.mrf.mxu0
        %v1286 = vadd.f32 0.0, %v1285
        %1287 = vmatmul.f32.gmra.mxu0 %v1260
        %v1288 = vpop.f32.mrf.mxu0
        %v1289 = vadd.f32 0.0, %v1288
        %1290 = vdwg.mxu0
        %1291 = vmatpush.msra.mxu0 0.0
        %1292 = vmatpush.msra.mxu0 0.0
        %1293 = vmatpush.msra.mxu0 0.0
        %1294 = vmatpush.msra.mxu0 0.0
        %1295 = vmatpush.msra.mxu0 0.0
        %1296 = vmatpush.msra.mxu0 0.0
        %1297 = vmatpush.msra.mxu0 0.0
        %1298 = vmatpush.msra.mxu0 0.0
        %1299 = vmatpush.msra.mxu0 0.0
        %1300 = vmatpush.msra.mxu0 0.0
        %1301 = vmatpush.msra.mxu0 0.0
        %1302 = vmatpush.msra.mxu0 0.0
        %1303 = vmatpush.msra.mxu0 %v1238
        %1304 = vmatpush.msra.mxu0 %v1230
        %1305 = vmatpush.msra.mxu0 %v1222
        %1306 = vmatpush.msra.mxu0 %v1214
        %1307 = vmatmul.f32.gmra.mxu0 %v1251
        %v1308 = vpop.f32.mrf.mxu0
        %v1309 = vadd.f32 0.0, %v1308
        %1310 = vmatmul.f32.gmra.mxu0 %v1254
        %v1311 = vpop.f32.mrf.mxu0
        %v1312 = vadd.f32 0.0, %v1311
        %1313 = vmatmul.f32.gmra.mxu0 %v1257
        %v1314 = vpop.f32.mrf.mxu0
        %v1315 = vadd.f32 0.0, %v1314
        %1316 = vmatmul.f32.gmra.mxu0 %v1260
        %v1317 = vpop.f32.mrf.mxu0
        %v1318 = vadd.f32 0.0, %v1317
        %1319 = vdwg.mxu0
        %1320 = vmatpush.msra.mxu0 0.0
        %1321 = vmatpush.msra.mxu0 0.0
        %1322 = vmatpush.msra.mxu0 0.0
        %1323 = vmatpush.msra.mxu0 0.0
        %1324 = vmatpush.msra.mxu0 0.0
        %1325 = vmatpush.msra.mxu0 0.0
        %1326 = vmatpush.msra.mxu0 0.0
        %1327 = vmatpush.msra.mxu0 0.0
        %1328 = vmatpush.msra.mxu0 0.0
        %1329 = vmatpush.msra.mxu0 0.0
        %1330 = vmatpush.msra.mxu0 0.0
        %1331 = vmatpush.msra.mxu0 0.0
        %1332 = vmatpush.msra.mxu0 %v1239
        %1333 = vmatpush.msra.mxu0 %v1231
        %1334 = vmatpush.msra.mxu0 %v1223
        %1335 = vmatpush.msra.mxu0 %v1215
        %1336 = vmatmul.f32.gmra.mxu0 %v1251
        %v1337 = vpop.f32.mrf.mxu0
        %v1338 = vadd.f32 0.0, %v1337
        %1339 = vmatmul.f32.gmra.mxu0 %v1254
        %v1340 = vpop.f32.mrf.mxu0
        %v1341 = vadd.f32 0.0, %v1340
        %1342 = vmatmul.f32.gmra.mxu0 %v1257
        %v1343 = vpop.f32.mrf.mxu0
        %v1344 = vadd.f32 0.0, %v1343
        %1345 = vmatmul.f32.gmra.mxu0 %v1260
        %v1346 = vpop.f32.mrf.mxu0
        %v1347 = vadd.f32 0.0, %v1346
        %1348 = vdwg.mxu0
        %1349 = vmatpush.msra.mxu0 0.0
        %1350 = vmatpush.msra.mxu0 0.0
        %1351 = vmatpush.msra.mxu0 0.0
        %1352 = vmatpush.msra.mxu0 0.0
        %1353 = vmatpush.msra.mxu0 0.0
        %1354 = vmatpush.msra.mxu0 0.0
        %1355 = vmatpush.msra.mxu0 0.0
        %1356 = vmatpush.msra.mxu0 0.0
        %1357 = vmatpush.msra.mxu0 0.0
        %1358 = vmatpush.msra.mxu0 0.0
        %1359 = vmatpush.msra.mxu0 0.0
        %1360 = vmatpush.msra.mxu0 0.0
        %1361 = vmatpush.msra.mxu0 %v1240
        %1362 = vmatpush.msra.mxu0 %v1232
        %1363 = vmatpush.msra.mxu0 %v1224
        %1364 = vmatpush.msra.mxu0 %v1216
        %1365 = vmatmul.f32.gmra.mxu0 %v1251
        %v1366 = vpop.f32.mrf.mxu0
        %v1367 = vadd.f32 0.0, %v1366
        %1368 = vmatmul.f32.gmra.mxu0 %v1254
        %v1369 = vpop.f32.mrf.mxu0
        %v1370 = vadd.f32 0.0, %v1369
        %1371 = vmatmul.f32.gmra.mxu0 %v1257
        %v1372 = vpop.f32.mrf.mxu0
        %v1373 = vadd.f32 0.0, %v1372
        %1374 = vmatmul.f32.gmra.mxu0 %v1260
        %v1375 = vpop.f32.mrf.mxu0
        %v1376 = vadd.f32 0.0, %v1375
        %1377 = vdwg.mxu0
        %1378 = vmatpush.msra.mxu0 0.0
        %1379 = vmatpush.msra.mxu0 0.0
        %1380 = vmatpush.msra.mxu0 0.0
        %1381 = vmatpush.msra.mxu0 0.0
        %1382 = vmatpush.msra.mxu0 0.0
        %1383 = vmatpush.msra.mxu0 0.0
        %1384 = vmatpush.msra.mxu0 0.0
        %1385 = vmatpush.msra.mxu0 0.0
        %1386 = vmatpush.msra.mxu0 0.0
        %1387 = vmatpush.msra.mxu0 0.0
        %1388 = vmatpush.msra.mxu0 0.0
        %1389 = vmatpush.msra.mxu0 0.0
        %1390 = vmatpush.msra.mxu0 %v1241
        %1391 = vmatpush.msra.mxu0 %v1233
        %1392 = vmatpush.msra.mxu0 %v1225
        %1393 = vmatpush.msra.mxu0 %v1217
        %1394 = vmatmul.f32.gmra.mxu0 %v1251
        %v1395 = vpop.f32.mrf.mxu0
        %v1396 = vadd.f32 0.0, %v1395
        %1397 = vmatmul.f32.gmra.mxu0 %v1254
        %v1398 = vpop.f32.mrf.mxu0
        %v1399 = vadd.f32 0.0, %v1398
        %1400 = vmatmul.f32.gmra.mxu0 %v1257
        %v1401 = vpop.f32.mrf.mxu0
        %v1402 = vadd.f32 0.0, %v1401
        %1403 = vmatmul.f32.gmra.mxu0 %v1260
        %v1404 = vpop.f32.mrf.mxu0
        %v1405 = vadd.f32 0.0, %v1404
        %1406 = vdwg.mxu0
        %1407 = vmatpush.msra.mxu0 0.0
        %1408 = vmatpush.msra.mxu0 0.0
        %1409 = vmatpush.msra.mxu0 0.0
        %1410 = vmatpush.msra.mxu0 0.0
        %1411 = vmatpush.msra.mxu0 0.0
        %1412 = vmatpush.msra.mxu0 0.0
        %1413 = vmatpush.msra.mxu0 0.0
        %1414 = vmatpush.msra.mxu0 0.0
        %1415 = vmatpush.msra.mxu0 0.0
        %1416 = vmatpush.msra.mxu0 0.0
        %1417 = vmatpush.msra.mxu0 0.0
        %1418 = vmatpush.msra.mxu0 0.0
        %1419 = vmatpush.msra.mxu0 %v1242
        %1420 = vmatpush.msra.mxu0 %v1234
        %1421 = vmatpush.msra.mxu0 %v1226
        %1422 = vmatpush.msra.mxu0 %v1218
        %1423 = vmatmul.f32.gmra.mxu0 %v1251
        %v1424 = vpop.f32.mrf.mxu0
        %v1425 = vadd.f32 0.0, %v1424
        %1426 = vmatmul.f32.gmra.mxu0 %v1254
        %v1427 = vpop.f32.mrf.mxu0
        %v1428 = vadd.f32 0.0, %v1427
        %1429 = vmatmul.f32.gmra.mxu0 %v1257
        %v1430 = vpop.f32.mrf.mxu0
        %v1431 = vadd.f32 0.0, %v1430
        %1432 = vmatmul.f32.gmra.mxu0 %v1260
        %v1433 = vpop.f32.mrf.mxu0
        %v1434 = vadd.f32 0.0, %v1433
        %1435 = vdwg.mxu0
        %1436 = vmatpush.msra.mxu0 0.0
        %1437 = vmatpush.msra.mxu0 0.0
        %1438 = vmatpush.msra.mxu0 0.0
        %1439 = vmatpush.msra.mxu0 0.0
        %1440 = vmatpush.msra.mxu0 0.0
        %1441 = vmatpush.msra.mxu0 0.0
        %1442 = vmatpush.msra.mxu0 0.0
        %1443 = vmatpush.msra.mxu0 0.0
        %1444 = vmatpush.msra.mxu0 0.0
        %1445 = vmatpush.msra.mxu0 0.0
        %1446 = vmatpush.msra.mxu0 0.0
        %1447 = vmatpush.msra.mxu0 0.0
        %1448 = vmatpush.msra.mxu0 %v1243
        %1449 = vmatpush.msra.mxu0 %v1235
        %1450 = vmatpush.msra.mxu0 %v1227
        %1451 = vmatpush.msra.mxu0 %v1219
        %1452 = vmatmul.f32.gmra.mxu0 %v1251
        %v1453 = vpop.f32.mrf.mxu0
        %v1454 = vadd.f32 0.0, %v1453
        %1455 = vmatmul.f32.gmra.mxu0 %v1254
        %v1456 = vpop.f32.mrf.mxu0
        %v1457 = vadd.f32 0.0, %v1456
        %1458 = vmatmul.f32.gmra.mxu0 %v1257
        %v1459 = vpop.f32.mrf.mxu0
        %v1460 = vadd.f32 0.0, %v1459
        %1461 = vmatmul.f32.gmra.mxu0 %v1260
        %v1462 = vpop.f32.mrf.mxu0
        %v1463 = vadd.f32 0.0, %v1462
        %1464 = vdwg.mxu0
        %1465 = vmatpush.msra.mxu0 0.0
        %1466 = vmatpush.msra.mxu0 0.0
        %1467 = vmatpush.msra.mxu0 0.0
        %1468 = vmatpush.msra.mxu0 0.0
        %1469 = vmatpush.msra.mxu0 0.0
        %1470 = vmatpush.msra.mxu0 0.0
        %1471 = vmatpush.msra.mxu0 0.0
        %1472 = vmatpush.msra.mxu0 0.0
        %1473 = vmatpush.msra.mxu0 0.0
        %1474 = vmatpush.msra.mxu0 0.0
        %1475 = vmatpush.msra.mxu0 0.0
        %1476 = vmatpush.msra.mxu0 0.0
        %1477 = vmatpush.msra.mxu0 %v1244
        %1478 = vmatpush.msra.mxu0 %v1236
        %1479 = vmatpush.msra.mxu0 %v1228
        %1480 = vmatpush.msra.mxu0 %v1220
        %1481 = vmatmul.f32.gmra.mxu0 %v1251
        %v1482 = vpop.f32.mrf.mxu0
        %v1483 = vadd.f32 0.0, %v1482
        %1484 = vmatmul.f32.gmra.mxu0 %v1254
        %v1485 = vpop.f32.mrf.mxu0
        %v1486 = vadd.f32 0.0, %v1485
        %1487 = vmatmul.f32.gmra.mxu0 %v1257
        %v1488 = vpop.f32.mrf.mxu0
        %v1489 = vadd.f32 0.0, %v1488
        %1490 = vmatmul.f32.gmra.mxu0 %v1260
        %v1491 = vpop.f32.mrf.mxu0
        %v1492 = vadd.f32 0.0, %v1491
        %1493 = vdwg.mxu0
        %v1494 = vmax.f32 %v1280, 0.0
        %v1495 = vmax.f32 %v1309, 0.0
        %v1496 = vmax.f32 %v1338, 0.0
        %v1497 = vmax.f32 %v1367, 0.0
        %v1498 = vmax.f32 %v1396, 0.0
        %v1499 = vmax.f32 %v1425, 0.0
        %v1500 = vmax.f32 %v1454, 0.0
        %v1501 = vmax.f32 %v1483, 0.0
        %v1502 = vmax.f32 %v1283, 0.0
        %v1503 = vmax.f32 %v1312, 0.0
        %v1504 = vmax.f32 %v1341, 0.0
        %v1505 = vmax.f32 %v1370, 0.0
        %v1506 = vmax.f32 %v1399, 0.0
        %v1507 = vmax.f32 %v1428, 0.0
        %v1508 = vmax.f32 %v1457, 0.0
        %v1509 = vmax.f32 %v1486, 0.0
        %v1510 = vmax.f32 %v1286, 0.0
        %v1511 = vmax.f32 %v1315, 0.0
        %v1512 = vmax.f32 %v1344, 0.0
        %v1513 = vmax.f32 %v1373, 0.0
        %v1514 = vmax.f32 %v1402, 0.0
        %v1515 = vmax.f32 %v1431, 0.0
        %v1516 = vmax.f32 %v1460, 0.0
        %v1517 = vmax.f32 %v1489, 0.0
        %v1518 = vmax.f32 %v1289, 0.0
        %v1519 = vmax.f32 %v1318, 0.0
        %v1520 = vmax.f32 %v1347, 0.0
        %v1521 = vmax.f32 %v1376, 0.0
        %v1522 = vmax.f32 %v1405, 0.0
        %v1523 = vmax.f32 %v1434, 0.0
        %v1524 = vmax.f32 %v1463, 0.0
        %v1525 = vmax.f32 %v1492, 0.0
        %v1526 = vld [vmem:[#allocation4] sm:$0xff]
        %v1527 = vld [vmem:[#allocation4 + $0x8] sm:$0xff]
        %v1528 = vld [vmem:[#allocation4 + $0x10] sm:$0xff]
        %v1529 = vld [vmem:[#allocation4 + $0x18] sm:$0xff]
        %v1531 = vsel %vm1249, %v1526, 0
        %v1534 = vsel %vm1249, %v1527, 0
        %v1537 = vsel %vm1249, %v1528, 0
        %v1540 = vsel %vm1249, %v1529, 0
        %1542 = vmatpush.msra.mxu0 0.0
        %1543 = vmatpush.msra.mxu0 0.0
        %1544 = vmatpush.msra.mxu0 0.0
        %1545 = vmatpush.msra.mxu0 0.0
        %1546 = vmatpush.msra.mxu0 0.0
        %1547 = vmatpush.msra.mxu0 0.0
        %1548 = vmatpush.msra.mxu0 0.0
        %1549 = vmatpush.msra.mxu0 0.0
        %1550 = vmatpush.msra.mxu0 0.0
        %1551 = vmatpush.msra.mxu0 0.0
        %1552 = vmatpush.msra.mxu0 0.0
        %1553 = vmatpush.msra.mxu0 0.0
        %1554 = vmatpush.msra.mxu0 %v1518
        %1555 = vmatpush.msra.mxu0 %v1510
        %1556 = vmatpush.msra.mxu0 %v1502
        %1557 = vmatpush.msra.mxu0 %v1494
        %1558 = vmatmul.f32.gmra.mxu0 %v1531
        %v1559 = vpop.f32.mrf.mxu0
        %v1560 = vadd.f32 0.0, %v1559
        %1561 = vmatmul.f32.gmra.mxu0 %v1534
        %v1562 = vpop.f32.mrf.mxu0
        %v1563 = vadd.f32 0.0, %v1562
        %1564 = vmatmul.f32.gmra.mxu0 %v1537
        %v1565 = vpop.f32.mrf.mxu0
        %v1566 = vadd.f32 0.0, %v1565
        %1567 = vmatmul.f32.gmra.mxu0 %v1540
        %v1568 = vpop.f32.mrf.mxu0
        %v1569 = vadd.f32 0.0, %v1568
        %1570 = vdwg.mxu0
        %1571 = vmatpush.msra.mxu0 0.0
        %1572 = vmatpush.msra.mxu0 0.0
        %1573 = vmatpush.msra.mxu0 0.0
        %1574 = vmatpush.msra.mxu0 0.0
        %1575 = vmatpush.msra.mxu0 0.0
        %1576 = vmatpush.msra.mxu0 0.0
        %1577 = vmatpush.msra.mxu0 0.0
        %1578 = vmatpush.msra.mxu0 0.0
        %1579 = vmatpush.msra.mxu0 0.0
        %1580 = vmatpush.msra.mxu0 0.0
        %1581 = vmatpush.msra.mxu0 0.0
        %1582 = vmatpush.msra.mxu0 0.0
        %1583 = vmatpush.msra.mxu0 %v1519
        %1584 = vmatpush.msra.mxu0 %v1511
        %1585 = vmatpush.msra.mxu0 %v1503
        %1586 = vmatpush.msra.mxu0 %v1495
        %1587 = vmatmul.f32.gmra.mxu0 %v1531
        %v1588 = vpop.f32.mrf.mxu0
        %v1589 = vadd.f32 0.0, %v1588
        %1590 = vmatmul.f32.gmra.mxu0 %v1534
        %v1591 = vpop.f32.mrf.mxu0
        %v1592 = vadd.f32 0.0, %v1591
        %1593 = vmatmul.f32.gmra.mxu0 %v1537
        %v1594 = vpop.f32.mrf.mxu0
        %v1595 = vadd.f32 0.0, %v1594
        %1596 = vmatmul.f32.gmra.mxu0 %v1540
        %v1597 = vpop.f32.mrf.mxu0
        %v1598 = vadd.f32 0.0, %v1597
        %1599 = vdwg.mxu0
        %1600 = vmatpush.msra.mxu0 0.0
        %1601 = vmatpush.msra.mxu0 0.0
        %1602 = vmatpush.msra.mxu0 0.0
        %1603 = vmatpush.msra.mxu0 0.0
        %1604 = vmatpush.msra.mxu0 0.0
        %1605 = vmatpush.msra.mxu0 0.0
        %1606 = vmatpush.msra.mxu0 0.0
        %1607 = vmatpush.msra.mxu0 0.0
        %1608 = vmatpush.msra.mxu0 0.0
        %1609 = vmatpush.msra.mxu0 0.0
        %1610 = vmatpush.msra.mxu0 0.0
        %1611 = vmatpush.msra.mxu0 0.0
        %1612 = vmatpush.msra.mxu0 %v1520
        %1613 = vmatpush.msra.mxu0 %v1512
        %1614 = vmatpush.msra.mxu0 %v1504
        %1615 = vmatpush.msra.mxu0 %v1496
        %1616 = vmatmul.f32.gmra.mxu0 %v1531
        %v1617 = vpop.f32.mrf.mxu0
        %v1618 = vadd.f32 0.0, %v1617
        %1619 = vmatmul.f32.gmra.mxu0 %v1534
        %v1620 = vpop.f32.mrf.mxu0
        %v1621 = vadd.f32 0.0, %v1620
        %1622 = vmatmul.f32.gmra.mxu0 %v1537
        %v1623 = vpop.f32.mrf.mxu0
        %v1624 = vadd.f32 0.0, %v1623
        %1625 = vmatmul.f32.gmra.mxu0 %v1540
        %v1626 = vpop.f32.mrf.mxu0
        %v1627 = vadd.f32 0.0, %v1626
        %1628 = vdwg.mxu0
        %1629 = vmatpush.msra.mxu0 0.0
        %1630 = vmatpush.msra.mxu0 0.0
        %1631 = vmatpush.msra.mxu0 0.0
        %1632 = vmatpush.msra.mxu0 0.0
        %1633 = vmatpush.msra.mxu0 0.0
        %1634 = vmatpush.msra.mxu0 0.0
        %1635 = vmatpush.msra.mxu0 0.0
        %1636 = vmatpush.msra.mxu0 0.0
        %1637 = vmatpush.msra.mxu0 0.0
        %1638 = vmatpush.msra.mxu0 0.0
        %1639 = vmatpush.msra.mxu0 0.0
        %1640 = vmatpush.msra.mxu0 0.0
        %1641 = vmatpush.msra.mxu0 %v1521
        %1642 = vmatpush.msra.mxu0 %v1513
        %1643 = vmatpush.msra.mxu0 %v1505
        %1644 = vmatpush.msra.mxu0 %v1497
        %1645 = vmatmul.f32.gmra.mxu0 %v1531
        %v1646 = vpop.f32.mrf.mxu0
        %v1647 = vadd.f32 0.0, %v1646
        %1648 = vmatmul.f32.gmra.mxu0 %v1534
        %v1649 = vpop.f32.mrf.mxu0
        %v1650 = vadd.f32 0.0, %v1649
        %1651 = vmatmul.f32.gmra.mxu0 %v1537
        %v1652 = vpop.f32.mrf.mxu0
        %v1653 = vadd.f32 0.0, %v1652
        %1654 = vmatmul.f32.gmra.mxu0 %v1540
        %v1655 = vpop.f32.mrf.mxu0
        %v1656 = vadd.f32 0.0, %v1655
        %1657 = vdwg.mxu0
        %1658 = vmatpush.msra.mxu0 0.0
        %1659 = vmatpush.msra.mxu0 0.0
        %1660 = vmatpush.msra.mxu0 0.0
        %1661 = vmatpush.msra.mxu0 0.0
        %1662 = vmatpush.msra.mxu0 0.0
        %1663 = vmatpush.msra.mxu0 0.0
        %1664 = vmatpush.msra.mxu0 0.0
        %1665 = vmatpush.msra.mxu0 0.0
        %1666 = vmatpush.msra.mxu0 0.0
        %1667 = vmatpush.msra.mxu0 0.0
        %1668 = vmatpush.msra.mxu0 0.0
        %1669 = vmatpush.msra.mxu0 0.0
        %1670 = vmatpush.msra.mxu0 %v1522
        %1671 = vmatpush.msra.mxu0 %v1514
        %1672 = vmatpush.msra.mxu0 %v1506
        %1673 = vmatpush.msra.mxu0 %v1498
        %1674 = vmatmul.f32.gmra.mxu0 %v1531
        %v1675 = vpop.f32.mrf.mxu0
        %v1676 = vadd.f32 0.0, %v1675
        %1677 = vmatmul.f32.gmra.mxu0 %v1534
        %v1678 = vpop.f32.mrf.mxu0
        %v1679 = vadd.f32 0.0, %v1678
        %1680 = vmatmul.f32.gmra.mxu0 %v1537
        %v1681 = vpop.f32.mrf.mxu0
        %v1682 = vadd.f32 0.0, %v1681
        %1683 = vmatmul.f32.gmra.mxu0 %v1540
        %v1684 = vpop.f32.mrf.mxu0
        %v1685 = vadd.f32 0.0, %v1684
        %1686 = vdwg.mxu0
        %1687 = vmatpush.msra.mxu0 0.0
        %1688 = vmatpush.msra.mxu0 0.0
        %1689 = vmatpush.msra.mxu0 0.0
        %1690 = vmatpush.msra.mxu0 0.0
        %1691 = vmatpush.msra.mxu0 0.0
        %1692 = vmatpush.msra.mxu0 0.0
        %1693 = vmatpush.msra.mxu0 0.0
        %1694 = vmatpush.msra.mxu0 0.0
        %1695 = vmatpush.msra.mxu0 0.0
        %1696 = vmatpush.msra.mxu0 0.0
        %1697 = vmatpush.msra.mxu0 0.0
        %1698 = vmatpush.msra.mxu0 0.0
        %1699 = vmatpush.msra.mxu0 %v1523
        %1700 = vmatpush.msra.mxu0 %v1515
        %1701 = vmatpush.msra.mxu0 %v1507
        %1702 = vmatpush.msra.mxu0 %v1499
        %1703 = vmatmul.f32.gmra.mxu0 %v1531
        %v1704 = vpop.f32.mrf.mxu0
        %v1705 = vadd.f32 0.0, %v1704
        %1706 = vmatmul.f32.gmra.mxu0 %v1534
        %v1707 = vpop.f32.mrf.mxu0
        %v1708 = vadd.f32 0.0, %v1707
        %1709 = vmatmul.f32.gmra.mxu0 %v1537
        %v1710 = vpop.f32.mrf.mxu0
        %v1711 = vadd.f32 0.0, %v1710
        %1712 = vmatmul.f32.gmra.mxu0 %v1540
        %v1713 = vpop.f32.mrf.mxu0
        %v1714 = vadd.f32 0.0, %v1713
        %1715 = vdwg.mxu0
        %1716 = vmatpush.msra.mxu0 0.0
        %1717 = vmatpush.msra.mxu0 0.0
        %1718 = vmatpush.msra.mxu0 0.0
        %1719 = vmatpush.msra.mxu0 0.0
        %1720 = vmatpush.msra.mxu0 0.0
        %1721 = vmatpush.msra.mxu0 0.0
        %1722 = vmatpush.msra.mxu0 0.0
        %1723 = vmatpush.msra.mxu0 0.0
        %1724 = vmatpush.msra.mxu0 0.0
        %1725 = vmatpush.msra.mxu0 0.0
        %1726 = vmatpush.msra.mxu0 0.0
        %1727 = vmatpush.msra.mxu0 0.0
        %1728 = vmatpush.msra.mxu0 %v1524
        %1729 = vmatpush.msra.mxu0 %v1516
        %1730 = vmatpush.msra.mxu0 %v1508
        %1731 = vmatpush.msra.mxu0 %v1500
        %1732 = vmatmul.f32.gmra.mxu0 %v1531
        %v1733 = vpop.f32.mrf.mxu0
        %v1734 = vadd.f32 0.0, %v1733
        %1735 = vmatmul.f32.gmra.mxu0 %v1534
        %v1736 = vpop.f32.mrf.mxu0
        %v1737 = vadd.f32 0.0, %v1736
        %1738 = vmatmul.f32.gmra.mxu0 %v1537
        %v1739 = vpop.f32.mrf.mxu0
        %v1740 = vadd.f32 0.0, %v1739
        %1741 = vmatmul.f32.gmra.mxu0 %v1540
        %v1742 = vpop.f32.mrf.mxu0
        %v1743 = vadd.f32 0.0, %v1742
        %1744 = vdwg.mxu0
        %1745 = vmatpush.msra.mxu0 0.0
        %1746 = vmatpush.msra.mxu0 0.0
        %1747 = vmatpush.msra.mxu0 0.0
        %1748 = vmatpush.msra.mxu0 0.0
        %1749 = vmatpush.msra.mxu0 0.0
        %1750 = vmatpush.msra.mxu0 0.0
        %1751 = vmatpush.msra.mxu0 0.0
        %1752 = vmatpush.msra.mxu0 0.0
        %1753 = vmatpush.msra.mxu0 0.0
        %1754 = vmatpush.msra.mxu0 0.0
        %1755 = vmatpush.msra.mxu0 0.0
        %1756 = vmatpush.msra.mxu0 0.0
        %1757 = vmatpush.msra.mxu0 %v1525
        %1758 = vmatpush.msra.mxu0 %v1517
        %1759 = vmatpush.msra.mxu0 %v1509
        %1760 = vmatpush.msra.mxu0 %v1501
        %1761 = vmatmul.f32.gmra.mxu0 %v1531
        %v1762 = vpop.f32.mrf.mxu0
        %v1763 = vadd.f32 0.0, %v1762
        %1764 = vmatmul.f32.gmra.mxu0 %v1534
        %v1765 = vpop.f32.mrf.mxu0
        %v1766 = vadd.f32 0.0, %v1765
        %1767 = vmatmul.f32.gmra.mxu0 %v1537
        %v1768 = vpop.f32.mrf.mxu0
        %v1769 = vadd.f32 0.0, %v1768
        %1770 = vmatmul.f32.gmra.mxu0 %v1540
        %v1771 = vpop.f32.mrf.mxu0
        %v1772 = vadd.f32 0.0, %v1771
        %1773 = vdwg.mxu0
        %v1774 = vmax.f32 %v1560, 0.0
        %v1775 = vmax.f32 %v1589, 0.0
        %v1776 = vmax.f32 %v1618, 0.0
        %v1777 = vmax.f32 %v1647, 0.0
        %v1778 = vmax.f32 %v1676, 0.0
        %v1779 = vmax.f32 %v1705, 0.0
        %v1780 = vmax.f32 %v1734, 0.0
        %v1781 = vmax.f32 %v1763, 0.0
        %v1782 = vmax.f32 %v1563, 0.0
        %v1783 = vmax.f32 %v1592, 0.0
        %v1784 = vmax.f32 %v1621, 0.0
        %v1785 = vmax.f32 %v1650, 0.0
        %v1786 = vmax.f32 %v1679, 0.0
        %v1787 = vmax.f32 %v1708, 0.0
        %v1788 = vmax.f32 %v1737, 0.0
        %v1789 = vmax.f32 %v1766, 0.0
        %v1790 = vmax.f32 %v1566, 0.0
        %v1791 = vmax.f32 %v1595, 0.0
        %v1792 = vmax.f32 %v1624, 0.0
        %v1793 = vmax.f32 %v1653, 0.0
        %v1794 = vmax.f32 %v1682, 0.0
        %v1795 = vmax.f32 %v1711, 0.0
        %v1796 = vmax.f32 %v1740, 0.0
        %v1797 = vmax.f32 %v1769, 0.0
        %v1798 = vmax.f32 %v1569, 0.0
        %v1799 = vmax.f32 %v1598, 0.0
        %v1800 = vmax.f32 %v1627, 0.0
        %v1801 = vmax.f32 %v1656, 0.0
        %v1802 = vmax.f32 %v1685, 0.0
        %v1803 = vmax.f32 %v1714, 0.0
        %v1804 = vmax.f32 %v1743, 0.0
        %v1805 = vmax.f32 %v1772, 0.0
        %v1806 = vld [vmem:[%s5] sm:$0xff]
        %v1808 = vsel %vm1249, %v1806, 0
        %1810 = vmatpush.msra.mxu0 0.0
        %1811 = vmatpush.msra.mxu0 0.0
        %1812 = vmatpush.msra.mxu0 0.0
        %1813 = vmatpush.msra.mxu0 0.0
        %1814 = vmatpush.msra.mxu0 0.0
        %1815 = vmatpush.msra.mxu0 0.0
        %1816 = vmatpush.msra.mxu0 0.0
        %1817 = vmatpush.msra.mxu0 0.0
        %1818 = vmatpush.msra.mxu0 0.0
        %1819 = vmatpush.msra.mxu0 0.0
        %1820 = vmatpush.msra.mxu0 0.0
        %1821 = vmatpush.msra.mxu0 0.0
        %1822 = vmatpush.msra.mxu0 %v1798
        %1823 = vmatpush.msra.mxu0 %v1790
        %1824 = vmatpush.msra.mxu0 %v1782
        %1825 = vmatpush.msra.mxu0 %v1774
        %1826 = vmatmul.f32.gmra.mxu0 %v1808
        %v1827 = vpop.f32.mrf.mxu0
        %v1828 = vadd.f32 0.0, %v1827
        %1829 = vdwg.mxu0
        %1830 = vmatpush.msra.mxu0 0.0
        %1831 = vmatpush.msra.mxu0 0.0
        %1832 = vmatpush.msra.mxu0 0.0
        %1833 = vmatpush.msra.mxu0 0.0
        %1834 = vmatpush.msra.mxu0 0.0
        %1835 = vmatpush.msra.mxu0 0.0
        %1836 = vmatpush.msra.mxu0 0.0
        %1837 = vmatpush.msra.mxu0 0.0
        %1838 = vmatpush.msra.mxu0 0.0
        %1839 = vmatpush.msra.mxu0 0.0
        %1840 = vmatpush.msra.mxu0 0.0
        %1841 = vmatpush.msra.mxu0 0.0
        %1842 = vmatpush.msra.mxu0 %v1799
        %1843 = vmatpush.msra.mxu0 %v1791
        %1844 = vmatpush.msra.mxu0 %v1783
        %1845 = vmatpush.msra.mxu0 %v1775
        %1846 = vmatmul.f32.gmra.mxu0 %v1808
        %v1847 = vpop.f32.mrf.mxu0
        %v1848 = vadd.f32 0.0, %v1847
        %1849 = vdwg.mxu0
        %1850 = vmatpush.msra.mxu0 0.0
        %1851 = vmatpush.msra.mxu0 0.0
        %1852 = vmatpush.msra.mxu0 0.0
        %1853 = vmatpush.msra.mxu0 0.0
        %1854 = vmatpush.msra.mxu0 0.0
        %1855 = vmatpush.msra.mxu0 0.0
        %1856 = vmatpush.msra.mxu0 0.0
        %1857 = vmatpush.msra.mxu0 0.0
        %1858 = vmatpush.msra.mxu0 0.0
        %1859 = vmatpush.msra.mxu0 0.0
        %1860 = vmatpush.msra.mxu0 0.0
        %1861 = vmatpush.msra.mxu0 0.0
        %1862 = vmatpush.msra.mxu0 %v1800
        %1863 = vmatpush.msra.mxu0 %v1792
        %1864 = vmatpush.msra.mxu0 %v1784
        %1865 = vmatpush.msra.mxu0 %v1776
        %1866 = vmatmul.f32.gmra.mxu0 %v1808
        %v1867 = vpop.f32.mrf.mxu0
        %v1868 = vadd.f32 0.0, %v1867
        %1869 = vdwg.mxu0
        %1870 = vmatpush.msra.mxu0 0.0
        %1871 = vmatpush.msra.mxu0 0.0
        %1872 = vmatpush.msra.mxu0 0.0
        %1873 = vmatpush.msra.mxu0 0.0
        %1874 = vmatpush.msra.mxu0 0.0
        %1875 = vmatpush.msra.mxu0 0.0
        %1876 = vmatpush.msra.mxu0 0.0
        %1877 = vmatpush.msra.mxu0 0.0
        %1878 = vmatpush.msra.mxu0 0.0
        %1879 = vmatpush.msra.mxu0 0.0
        %1880 = vmatpush.msra.mxu0 0.0
        %1881 = vmatpush.msra.mxu0 0.0
        %1882 = vmatpush.msra.mxu0 %v1801
        %1883 = vmatpush.msra.mxu0 %v1793
        %1884 = vmatpush.msra.mxu0 %v1785
        %1885 = vmatpush.msra.mxu0 %v1777
        %1886 = vmatmul.f32.gmra.mxu0 %v1808
        %v1887 = vpop.f32.mrf.mxu0
        %v1888 = vadd.f32 0.0, %v1887
        %1889 = vdwg.mxu0
        %1890 = vmatpush.msra.mxu0 0.0
        %1891 = vmatpush.msra.mxu0 0.0
        %1892 = vmatpush.msra.mxu0 0.0
        %1893 = vmatpush.msra.mxu0 0.0
        %1894 = vmatpush.msra.mxu0 0.0
        %1895 = vmatpush.msra.mxu0 0.0
        %1896 = vmatpush.msra.mxu0 0.0
        %1897 = vmatpush.msra.mxu0 0.0
        %1898 = vmatpush.msra.mxu0 0.0
        %1899 = vmatpush.msra.mxu0 0.0
        %1900 = vmatpush.msra.mxu0 0.0
        %1901 = vmatpush.msra.mxu0 0.0
        %1902 = vmatpush.msra.mxu0 %v1802
        %1903 = vmatpush.msra.mxu0 %v1794
        %1904 = vmatpush.msra.mxu0 %v1786
        %1905 = vmatpush.msra.mxu0 %v1778
        %1906 = vmatmul.f32.gmra.mxu0 %v1808
        %v1907 = vpop.f32.mrf.mxu0
        %v1908 = vadd.f32 0.0, %v1907
        %1909 = vdwg.mxu0
        %1910 = vmatpush.msra.mxu0 0.0
        %1911 = vmatpush.msra.mxu0 0.0
        %1912 = vmatpush.msra.mxu0 0.0
        %1913 = vmatpush.msra.mxu0 0.0
        %1914 = vmatpush.msra.mxu0 0.0
        %1915 = vmatpush.msra.mxu0 0.0
        %1916 = vmatpush.msra.mxu0 0.0
        %1917 = vmatpush.msra.mxu0 0.0
        %1918 = vmatpush.msra.mxu0 0.0
        %1919 = vmatpush.msra.mxu0 0.0
        %1920 = vmatpush.msra.mxu0 0.0
        %1921 = vmatpush.msra.mxu0 0.0
        %1922 = vmatpush.msra.mxu0 %v1803
        %1923 = vmatpush.msra.mxu0 %v1795
        %1924 = vmatpush.msra.mxu0 %v1787
        %1925 = vmatpush.msra.mxu0 %v1779
        %1926 = vmatmul.f32.gmra.mxu0 %v1808
        %v1927 = vpop.f32.mrf.mxu0
        %v1928 = vadd.f32 0.0, %v1927
        %1929 = vdwg.mxu0
        %1930 = vmatpush.msra.mxu0 0.0
        %1931 = vmatpush.msra.mxu0 0.0
        %1932 = vmatpush.msra.mxu0 0.0
        %1933 = vmatpush.msra.mxu0 0.0
        %1934 = vmatpush.msra.mxu0 0.0
        %1935 = vmatpush.msra.mxu0 0.0
        %1936 = vmatpush.msra.mxu0 0.0
        %1937 = vmatpush.msra.mxu0 0.0
        %1938 = vmatpush.msra.mxu0 0.0
        %1939 = vmatpush.msra.mxu0 0.0
        %1940 = vmatpush.msra.mxu0 0.0
        %1941 = vmatpush.msra.mxu0 0.0
        %1942 = vmatpush.msra.mxu0 %v1804
        %1943 = vmatpush.msra.mxu0 %v1796
        %1944 = vmatpush.msra.mxu0 %v1788
        %1945 = vmatpush.msra.mxu0 %v1780
        %1946 = vmatmul.f32.gmra.mxu0 %v1808
        %v1947 = vpop.f32.mrf.mxu0
        %v1948 = vadd.f32 0.0, %v1947
        %1949 = vdwg.mxu0
        %1950 = vmatpush.msra.mxu0 0.0
        %1951 = vmatpush.msra.mxu0 0.0
        %1952 = vmatpush.msra.mxu0 0.0
        %1953 = vmatpush.msra.mxu0 0.0
        %1954 = vmatpush.msra.mxu0 0.0
        %1955 = vmatpush.msra.mxu0 0.0
        %1956 = vmatpush.msra.mxu0 0.0
        %1957 = vmatpush.msra.mxu0 0.0
        %1958 = vmatpush.msra.mxu0 0.0
        %1959 = vmatpush.msra.mxu0 0.0
        %1960 = vmatpush.msra.mxu0 0.0
        %1961 = vmatpush.msra.mxu0 0.0
        %1962 = vmatpush.msra.mxu0 %v1805
        %1963 = vmatpush.msra.mxu0 %v1797
        %1964 = vmatpush.msra.mxu0 %v1789
        %1965 = vmatpush.msra.mxu0 %v1781
        %1966 = vmatmul.f32.gmra.mxu0 %v1808
        %v1967 = vpop.f32.mrf.mxu0
        %v1968 = vadd.f32 0.0, %v1967
        %1969 = vdwg.mxu0
        %1970 = vst [vmem:[%s303] sm:$0xff] %v1828
        %1971 = vst [vmem:[%s303 + $0x8] sm:$0xff] %v1848
        %1972 = vst [vmem:[%s303 + $0x10] sm:$0xff] %v1868
        %1973 = vst [vmem:[%s303 + $0x18] sm:$0xff] %v1888
        %1974 = vst [vmem:[%s303 + $0x20] sm:$0xff] %v1908
        %1975 = vst [vmem:[%s303 + $0x28] sm:$0xff] %v1928
        %1976 = vst [vmem:[%s303 + $0x30] sm:$0xff] %v1948
        %1977 = vst [vmem:[%s303 + $0x38] sm:$0xff] %v1968
        %s1978 = smul.u32 8, %s19
        %p1979 = scmp.lt.s32.totalorder %s1978, 15
        %s1980 = scalar_select %p1979, %s1978, 15
        %s1981 = smul.addr %s1980, 8
        %s1982 = scalar_lea.vmem %s6, %s1981
        // Predicated region
        $region53: #{mlp_predictor_scores.1} parent=43 // pred_check
          %p1983 = pneg %p173
        $region54: #{mlp_predictor_scores.1} parent=43 // pred_check_branch
          %1985 = sbr.rel (%p1983) target = $region56
        $region55: #{mlp_predictor_scores.1} parent=43 // pred_region
          %s1986 = smul.u32 8, %s19
        $region56: #{mlp_predictor_scores.1} parent=43 // pred_fallthru
          _
      $region44: #{mlp_predictor_scores.1} parent=5 // pred_fallthru
        _
      %p1987 = scmp.le.s32.totalorder 2, %s14
      // Predicated region
      $region57: #{mlp_predictor_scores.1} parent=5 // pred_check
        %p1988 = pneg %p1987
      $region58: #{mlp_predictor_scores.1} parent=5 // pred_check_branch
        %1990 = sbr.rel (%p1988) target = $region60
      $region59: #{mlp_predictor_scores.1} parent=5 // pred_region
        %s1991 = ssub.s32 %s14, 2
        // Predicated region
        $region61: #{mlp_predictor_scores.1} parent=59 // pred_check
          %p1992 = pneg %p179
        $region62: #{mlp_predictor_scores.1} parent=59 // pred_check_branch
          %1994 = sbr.rel (%p1992) target = $region64
        $region63: #{mlp_predictor_scores.1} parent=59 // pred_region
          %s1995 = smul.u32 8, %s20
          %p1996 = scmp.lt.s32.totalorder %s1995, 15
          %s1997 = scalar_select %p1996, %s1995, 15
          %s1998 = smul.addr %s1997, 8
          %s1999 = scalar_lea.vmem %s6, %s1998
        $region64: #{mlp_predictor_scores.1} parent=59 // pred_fallthru
          _
      $region60: #{mlp_predictor_scores.1} parent=5 // pred_fallthru
        _
    $region6: #{mlp_predictor_scores.1} parent=1 // loop_footer
      %s18 = sadd.s32 1, %s14
    $region7: #{mlp_predictor_scores.1} parent=1 // loop_footer_branch
      %13 = sbr.rel target = $region3
    $region8: #{mlp_predictor_scores.1} parent=1 // loop_exit
      _
    %2000 = vsyncpa [#allocation3], 1
    %s2001 = scalar_lea.sflag [#allocation3], 1
    %2002 = vsyncpa %s2001, 1
    %2003 = vsyncpa [#allocation5], 1

</llo_original>
